<compile_context>
chip_gen: v7x
topology: tpu7x:2x2x1
jax: 0.10.0
libtpu: 0.0.40
codegen_flags: <defaults>
</compile_context>

<pallas_src>
import functools

import jax
import jax.numpy as jnp
from jax.experimental import pallas as pl
from jax.experimental.pallas import tpu as pltpu


def _round_up(x: int, m: int) -> int:
    return ((x + m - 1) // m) * m


def _choose_tm(m: int, tm_max: int) -> int:
    """Row tile: multiple of 256, and >= 2 grid steps whenever M > 256."""
    tm_max = max(256, _round_up(tm_max, 256))
    if m <= 256:
        return 256
    half = _round_up(-(-m // 2), 256)   # ceil(M/2) rounded up to 256
    return min(tm_max, half)


# ----------------------------------------------------------------------------
# Fused kernel: x @ W + b  -> (+ residual) -> LayerNorm(eps=1e-12)
# ----------------------------------------------------------------------------
def self_output_kernel(x_ref, res_ref, w_ref, b_ref, gamma_ref, beta_ref, o_ref):
    # MXU matmul in the operands' native dtype (bf16-native on all gens),
    # accumulated in f32. Do NOT upcast operands before the dot.
    h = jnp.dot(x_ref[...], w_ref[...], preferred_element_type=jnp.float32)  # (tm, H)
    h = h + b_ref[...].astype(jnp.float32)                                    # bias

    # TODO(synk): dropout is identity at inference; training-mode RNG dropout
    # (pltpu.prng_seed/prng_random_bits masking) is intentionally omitted.

    # Residual connection (Add).
    h = h + res_ref[...].astype(jnp.float32)

    # LayerNorm over the hidden axis, eps = 1e-12, computed in f32.
    mean = jnp.mean(h, axis=-1, keepdims=True)
    centered = h - mean
    var = jnp.mean(centered * centered, axis=-1, keepdims=True)
    inv = jax.lax.rsqrt(var + 1e-12)
    h = centered * inv * gamma_ref[...].astype(jnp.float32) \
        + beta_ref[...].astype(jnp.float32)

    o_ref[...] = h.astype(o_ref.dtype)


# ----------------------------------------------------------------------------
# Wrapper
# ----------------------------------------------------------------------------
@functools.partial(jax.jit, static_argnames=("tm",))
def bert_self_output(hidden_states, input_tensor, params, *, tm=512):
    """hidden_states, input_tensor: [B, S, H] -> [B, S, H]."""
    B, S, H = hidden_states.shape
    M = B * S
    out_dtype = hidden_states.dtype

    x = hidden_states.reshape(M, H)
    res = input_tensor.reshape(M, H)
    w = params["w_dense"]          # [H_in, H_out]
    b = params["b_dense"]          # [1, H]
    gamma = params["ln_gamma"]     # [1, H]
    beta = params["ln_beta"]       # [1, H]

    tm_eff = _choose_tm(M, tm)
    grid = (pl.cdiv(M, tm_eff),)   # ragged last block; OOB rows never written

    # VMEM budget: x/res/out tiles double-buffered + single-buffered params.
    in_bytes = x.dtype.itemsize
    w_bytes = w.dtype.itemsize
    out_bytes = jnp.dtype(out_dtype).itemsize
    tile_elems = tm_eff * H
    vmem_need = (2 * 2 * tile_elems * in_bytes      # x, res (double-buffered)
                 + 2 * tile_elems * out_bytes       # out   (double-buffered)
                 + H * H * w_bytes                  # resident weight
                 + 3 * H * 4)                       # bias / gamma / beta
    vmem_limit = int(min(48 * 1024 * 1024, max(32 * 1024 * 1024, 2 * vmem_need)))

    cost = pl.CostEstimate(
        flops=2 * M * H * H + 10 * M * H,
        transcendentals=M,          # one rsqrt per row
        bytes_accessed=(2 * M * H * in_bytes + M * H * out_bytes
                        + H * H * w_bytes + 3 * H * 4),
    )

    # Grid-invariant operands: constant index_map, fetched once -> single buffer.
    resident = functools.partial(pl.BlockSpec, pipeline_mode=pl.Buffered(1))

    out = pl.pallas_call(
        self_output_kernel,
        out_shape=jax.ShapeDtypeStruct((M, H), out_dtype),
        grid_spec=pltpu.PrefetchScalarGridSpec(
            num_scalar_prefetch=0,
            grid=grid,
            in_specs=[
                pl.BlockSpec((tm_eff, H), lambda i: (i, 0)),   # x tile
                pl.BlockSpec((tm_eff, H), lambda i: (i, 0)),   # residual tile
                resident((H, H), lambda i: (0, 0)),            # dense weight [in, out]
                resident((1, H), lambda i: (0, 0)),            # dense bias
                resident((1, H), lambda i: (0, 0)),            # LN gamma
                resident((1, H), lambda i: (0, 0)),            # LN beta
            ],
            out_specs=pl.BlockSpec((tm_eff, H), lambda i: (i, 0)),
        ),
        compiler_params=pltpu.CompilerParams(
            dimension_semantics=("parallel",),
            vmem_limit_bytes=vmem_limit,
        ),
        cost_estimate=cost,
    )(x, res, w, b, gamma, beta)

    return out.reshape(B, S, H)


# ----------------------------------------------------------------------------
# Pure-JAX reference for correctness check (all-f32 math)
# ----------------------------------------------------------------------------
def reference(hidden_states, input_tensor, params):
    x = hidden_states.astype(jnp.float32)
    h = x @ params["w_dense"].astype(jnp.float32) + params["b_dense"].astype(jnp.float32)
    h = h + input_tensor.astype(jnp.float32)
    mean = jnp.mean(h, axis=-1, keepdims=True)
    var = jnp.mean((h - mean) ** 2, axis=-1, keepdims=True)
    h = (h - mean) * jax.lax.rsqrt(var + 1e-12)
    return h * params["ln_gamma"].astype(jnp.float32) + params["ln_beta"].astype(jnp.float32)


if __name__ == "__main__":
    # Small shapes; S chosen so M = B*S = 200 is NOT a multiple of the 256-row
    # tile, exercising the ragged-last-block path. H is a multiple of 128
    # (lane-dense output).
    B, S, H = 2, 100, 256

    key = jax.random.PRNGKey(0)
    k_x, k_r, k_w, k_b = jax.random.split(key, 4)

    # Activations / residual in bf16 (MXU-native, halves HBM traffic).
    hidden_states = jax.random.normal(k_x, (B, S, H), dtype=jnp.float32).astype(jnp.bfloat16)
    input_tensor = jax.random.normal(k_r, (B, S, H), dtype=jnp.float32).astype(jnp.bfloat16)

    # PyTorch nn.Linear stores weight as [out, in] and bias as (H,). Make the
    # layout conversion explicit at the loading boundary.
    w_pt = jax.random.normal(k_w, (H, H), dtype=jnp.float32) * 0.02   # [out, in]
    b_pt = jax.random.normal(k_b, (H,), dtype=jnp.float32) * 0.02     # (H,)

    params = {
        "w_dense": w_pt.T.astype(jnp.bfloat16),   # [in, out] so kernel does x @ W
        "b_dense": b_pt.reshape(1, H),            # f32 (added in f32 in-kernel)
        "ln_gamma": jnp.ones((1, H), dtype=jnp.float32),
        "ln_beta": jnp.zeros((1, H), dtype=jnp.float32),
    }

    out = bert_self_output(hidden_states, input_tensor, params)
    out = jax.block_until_ready(out)

    ref = reference(hidden_states, input_tensor, params)
    assert out.shape == (B, S, H), out.shape
    # bf16 inputs/weight + bf16 output cast vs f32 reference -> relaxed tolerance.
    assert jnp.allclose(out.astype(jnp.float32), ref, atol=5e-2, rtol=5e-2), \
        "mismatch vs reference"

    print("KERNEL_OK")
</pallas_src>

<mosaic_0001>
module attributes {stable_mosaic.version = 11 : i64} {
  func.func @self_output_kernel(%arg0: i32, %arg1: memref<256x256xbf16, #tpu.memory_space<vmem>>, %arg2: memref<256x256xbf16, #tpu.memory_space<vmem>>, %arg3: memref<256x256xbf16, #tpu.memory_space<vmem>>, %arg4: memref<1x256xf32, #tpu.memory_space<vmem>>, %arg5: memref<1x256xf32, #tpu.memory_space<vmem>>, %arg6: memref<1x256xf32, #tpu.memory_space<vmem>>, %arg7: memref<256x256xbf16, #tpu.memory_space<vmem>>) attributes {dimension_semantics = [#tpu.dimension_semantics<parallel>], iteration_bounds = array<i64: 1>, scalar_prefetch = 0 : i64, scratch_operands = 0 : i64, tpu.core_type = #tpu.core_type<tc>, window_params = [{transform_indices = @transform_0, window_bounds = array<i64: 256, 256>}, {transform_indices = @transform_1, window_bounds = array<i64: 256, 256>}, {pipeline_mode = #tpu.pipeline_mode<synchronous>, transform_indices = @transform_2, window_bounds = array<i64: 256, 256>}, {pipeline_mode = #tpu.pipeline_mode<synchronous>, transform_indices = @transform_3, window_bounds = array<i64: 1, 256>}, {pipeline_mode = #tpu.pipeline_mode<synchronous>, transform_indices = @transform_4, window_bounds = array<i64: 1, 256>}, {pipeline_mode = #tpu.pipeline_mode<synchronous>, transform_indices = @transform_5, window_bounds = array<i64: 1, 256>}, {transform_indices = @transform_6, window_bounds = array<i64: 256, 256>}]} {
    %c0 = arith.constant 0 : index
    %c0_0 = arith.constant 0 : index
    %0 = vector.load %arg1[%c0, %c0_0] : memref<256x256xbf16, #tpu.memory_space<vmem>>, vector<256x256xbf16>
    %c0_1 = arith.constant 0 : index
    %c0_2 = arith.constant 0 : index
    %1 = vector.load %arg3[%c0_1, %c0_2] : memref<256x256xbf16, #tpu.memory_space<vmem>>, vector<256x256xbf16>
    %cst = arith.constant dense<0.000000e+00> : vector<256x256xf32>
    %2 = tpu.matmul %0, %1, %cst {dimension_numbers = #tpu.dot_dimension_numbers<[1], [0], [0], [1], [0, 0, 1, 1], [], []>} : vector<256x256xbf16>, vector<256x256xbf16>, vector<256x256xf32> -> vector<256x256xf32>
    %c0_3 = arith.constant 0 : index
    %c0_4 = arith.constant 0 : index
    %3 = vector.load %arg4[%c0_3, %c0_4] : memref<1x256xf32, #tpu.memory_space<vmem>>, vector<1x256xf32>
    %4 = vector.broadcast %3 : vector<1x256xf32> to vector<256x256xf32>
    %5 = arith.addf %2, %4 : vector<256x256xf32>
    %c0_5 = arith.constant 0 : index
    %c0_6 = arith.constant 0 : index
    %6 = vector.load %arg2[%c0_5, %c0_6] : memref<256x256xbf16, #tpu.memory_space<vmem>>, vector<256x256xbf16>
    %7 = arith.extf %6 : vector<256x256xbf16> to vector<256x256xf32>
    %8 = arith.addf %5, %7 : vector<256x256xf32>
    %cst_7 = arith.constant dense<0.000000e+00> : vector<256xf32>
    %9 = vector.multi_reduction <add>, %8, %cst_7 [1] : vector<256x256xf32> to vector<256xf32>
    %10 = vector.shape_cast %9 : vector<256xf32> to vector<256x1xf32>
    %cst_8 = arith.constant 2.560000e+02 : f32
    %11 = vector.broadcast %cst_8 : f32 to vector<256x1xf32>
    %12 = arith.divf %10, %11 : vector<256x1xf32>
    %13 = vector.broadcast %12 : vector<256x1xf32> to vector<256x256xf32>
    %14 = arith.subf %8, %13 : vector<256x256xf32>
    %15 = arith.mulf %14, %14 : vector<256x256xf32>
    %cst_9 = arith.constant dense<0.000000e+00> : vector<256xf32>
    %16 = vector.multi_reduction <add>, %15, %cst_9 [1] : vector<256x256xf32> to vector<256xf32>
    %17 = vector.shape_cast %16 : vector<256xf32> to vector<256x1xf32>
    %cst_10 = arith.constant 2.560000e+02 : f32
    %18 = vector.broadcast %cst_10 : f32 to vector<256x1xf32>
    %19 = arith.divf %17, %18 : vector<256x1xf32>
    %cst_11 = arith.constant 9.99999996E-13 : f32
    %20 = vector.broadcast %cst_11 : f32 to vector<256x1xf32>
    %21 = arith.addf %19, %20 : vector<256x1xf32>
    %22 = math.rsqrt %21 : vector<256x1xf32>
    %23 = vector.broadcast %22 : vector<256x1xf32> to vector<256x256xf32>
    %24 = arith.mulf %14, %23 : vector<256x256xf32>
    %c0_12 = arith.constant 0 : index
    %c0_13 = arith.constant 0 : index
    %25 = vector.load %arg5[%c0_12, %c0_13] : memref<1x256xf32, #tpu.memory_space<vmem>>, vector<1x256xf32>
    %26 = vector.broadcast %25 : vector<1x256xf32> to vector<256x256xf32>
    %27 = arith.mulf %24, %26 : vector<256x256xf32>
    %c0_14 = arith.constant 0 : index
    %c0_15 = arith.constant 0 : index
    %28 = vector.load %arg6[%c0_14, %c0_15] : memref<1x256xf32, #tpu.memory_space<vmem>>, vector<1x256xf32>
    %29 = vector.broadcast %28 : vector<1x256xf32> to vector<256x256xf32>
    %30 = arith.addf %27, %29 : vector<256x256xf32>
    %31 = arith.truncf %30 : vector<256x256xf32> to vector<256x256xbf16>
    %c0_16 = arith.constant 0 : index
    %c0_17 = arith.constant 0 : index
    %32 = vector.load %arg7[%c0_16, %c0_17] : memref<256x256xbf16, #tpu.memory_space<vmem>>, vector<256x256xbf16>
    tpu.vector_store %arg7[%c0_16, %c0_17], %31 {strides = array<i32>} : memref<256x256xbf16, #tpu.memory_space<vmem>>, vector<256x256xbf16>,
    return
  }
  func.func @transform_0(%arg0: i32) -> (i32, i32) {
    %c0_i32 = arith.constant 0 : i32
    %c0_i32_0 = arith.constant 0 : i32
    return %arg0, %c0_i32 : i32, i32
  }
  func.func @transform_1(%arg0: i32) -> (i32, i32) {
    %c0_i32 = arith.constant 0 : i32
    %c0_i32_0 = arith.constant 0 : i32
    return %arg0, %c0_i32 : i32, i32
  }
  func.func @transform_2(%arg0: i32) -> (i32, i32) {
    %c0_i32 = arith.constant 0 : i32
    %c0_i32_0 = arith.constant 0 : i32
    %c0_i32_1 = arith.constant 0 : i32
    return %c0_i32, %c0_i32_0 : i32, i32
  }
  func.func @transform_3(%arg0: i32) -> (i32, i32) {
    %c0_i32 = arith.constant 0 : i32
    %c0_i32_0 = arith.constant 0 : i32
    %c0_i32_1 = arith.constant 0 : i32
    return %c0_i32, %c0_i32_0 : i32, i32
  }
  func.func @transform_4(%arg0: i32) -> (i32, i32) {
    %c0_i32 = arith.constant 0 : i32
    %c0_i32_0 = arith.constant 0 : i32
    %c0_i32_1 = arith.constant 0 : i32
    return %c0_i32, %c0_i32_0 : i32, i32
  }
  func.func @transform_5(%arg0: i32) -> (i32, i32) {
    %c0_i32 = arith.constant 0 : i32
    %c0_i32_0 = arith.constant 0 : i32
    %c0_i32_1 = arith.constant 0 : i32
    return %c0_i32, %c0_i32_0 : i32, i32
  }
  func.func @transform_6(%arg0: i32) -> (i32, i32) {
    %c0_i32 = arith.constant 0 : i32
    %c0_i32_0 = arith.constant 0 : i32
    return %arg0, %c0_i32 : i32, i32
  }
}

</mosaic_0001>

<llo_original>
// kernel: bert_self_output.1
$region0: #{bert_self_output.1}
  #allocation0 [shape = 'u32[]', space=smem, size = 0x4, offset = 0x4, fixed_abs, tag = 'smem constant byte address 0x4 - core index']
  #allocation1 [shape = 'u32[144,128]{1,0:T(1,128)}', space=vmem, size = 0x12000, scoped, tag = 'internal scratch']
  %s0 = inlined_call_operand.vmem [shape: bf16[200,256], index: 0, kind: input, shape index: {}]
  %s1 = inlined_call_operand.vmem [shape: bf16[200,256], index: 1, kind: input, shape index: {}]
  %s2 = inlined_call_operand.vmem [shape: bf16[256,256], index: 2, kind: input, shape index: {}]
  %s3 = inlined_call_operand.vmem [shape: f32[1,256], index: 3, kind: input, shape index: {}]
  %s4 = inlined_call_operand.vmem [shape: f32[1,256], index: 4, kind: input, shape index: {}]
  %s5 = inlined_call_operand.vmem [shape: f32[1,256], index: 5, kind: input, shape index: {}]
  %s6 = inlined_call_operand.vmem [shape: bf16[200,256], index: 6, kind: output, shape index: {}]
  %s7 = sld [smem:[#allocation0]]
  $region68: #{bert_self_output.1} parent=0
    _
  %s9 = ssub.s32 1, %s7
  %s10 = scalar_select 0, %s9, %s7
  $region1: #{bert_self_output.1} parent=0
    #allocation2 [shape = 'u8[131072]{0}', space=vmem, size = 0x20000, scoped, tag = 'output window, operand 0, single buffered']
    // Predicated region
    $region2: #{bert_self_output.1} parent=1 // pred_check
      _
    $region3: #{bert_self_output.1} parent=1 // pred_check_branch
      %12 = sbr.rel (0) target = $region5
    $region4: #{bert_self_output.1} parent=1 // pred_region
      _
    $region5: #{bert_self_output.1} parent=1 // pred_fallthru
      _
    // Predicated region
    $region6: #{bert_self_output.1} parent=1 // pred_check
      _
    $region7: #{bert_self_output.1} parent=1 // pred_check_branch
      %14 = sbr.rel (0) target = $region9
    $region8: #{bert_self_output.1} parent=1 // pred_region
      _
    $region9: #{bert_self_output.1} parent=1 // pred_fallthru
      _
    // Predicated region
    $region10: #{bert_self_output.1} parent=1 // pred_check
      _
    $region11: #{bert_self_output.1} parent=1 // pred_check_branch
      %16 = sbr.rel (0) target = $region13
    $region12: #{bert_self_output.1} parent=1 // pred_region
      _
    $region13: #{bert_self_output.1} parent=1 // pred_fallthru
      _
    // Predicated region
    $region14: #{bert_self_output.1} parent=1 // pred_check
      _
    $region15: #{bert_self_output.1} parent=1 // pred_check_branch
      %18 = sbr.rel (0) target = $region17
    $region16: #{bert_self_output.1} parent=1 // pred_region
      _
    $region17: #{bert_self_output.1} parent=1 // pred_fallthru
      _
    // Predicated region
    $region18: #{bert_self_output.1} parent=1 // pred_check
      _
    $region19: #{bert_self_output.1} parent=1 // pred_check_branch
      %20 = sbr.rel (0) target = $region21
    $region20: #{bert_self_output.1} parent=1 // pred_region
      _
    $region21: #{bert_self_output.1} parent=1 // pred_fallthru
      _
    // Predicated region
    $region22: #{bert_self_output.1} parent=1 // pred_check
      _
    $region23: #{bert_self_output.1} parent=1 // pred_check_branch
      %22 = sbr.rel (0) target = $region25
    $region24: #{bert_self_output.1} parent=1 // pred_region
      _
    $region25: #{bert_self_output.1} parent=1 // pred_fallthru
      _
    %v23 = vld [vmem:[%s0] sm:$0xff]
    %v24 = vld [vmem:[%s0 + $0x8] sm:$0xff]
    %v25 = vld [vmem:[%s0 + $0x10] sm:$0xff]
    %v26 = vld [vmem:[%s0 + $0x18] sm:$0xff]
    %v27 = vld [vmem:[%s0 + $0x20] sm:$0xff]
    %v28 = vld [vmem:[%s0 + $0x28] sm:$0xff]
    %v29 = vld [vmem:[%s0 + $0x30] sm:$0xff]
    %v30 = vld [vmem:[%s0 + $0x38] sm:$0xff]
    %v31 = vld [vmem:[%s0 + $0x40] sm:$0xff]
    %v32 = vld [vmem:[%s0 + $0x48] sm:$0xff]
    %v33 = vld [vmem:[%s0 + $0x50] sm:$0xff]
    %v34 = vld [vmem:[%s0 + $0x58] sm:$0xff]
    %v35 = vld [vmem:[%s0 + $0x60] sm:$0xff]
    %v36 = vld [vmem:[%s0 + $0x68] sm:$0xff]
    %v37 = vld [vmem:[%s0 + $0x70] sm:$0xff]
    %v38 = vld [vmem:[%s0 + $0x78] sm:$0xff]
    %v39 = vld [vmem:[%s0 + $0x80] sm:$0xff]
    %v40 = vld [vmem:[%s0 + $0x88] sm:$0xff]
    %v41 = vld [vmem:[%s0 + $0x90] sm:$0xff]
    %v42 = vld [vmem:[%s0 + $0x98] sm:$0xff]
    %v43 = vld [vmem:[%s0 + $0xa0] sm:$0xff]
    %v44 = vld [vmem:[%s0 + $0xa8] sm:$0xff]
    %v45 = vld [vmem:[%s0 + $0xb0] sm:$0xff]
    %v46 = vld [vmem:[%s0 + $0xb8] sm:$0xff]
    %v47 = vld [vmem:[%s0 + $0xc0] sm:$0xff]
    %v48 = vld [vmem:[%s0 + $0xc8] sm:$0xff]
    %v49 = vld [vmem:[%s0 + $0xd0] sm:$0xff]
    %v50 = vld [vmem:[%s0 + $0xd8] sm:$0xff]
    %v51 = vld [vmem:[%s0 + $0xe0] sm:$0xff]
    %v52 = vld [vmem:[%s0 + $0xe8] sm:$0xff]
    %v53 = vld [vmem:[%s0 + $0xf0] sm:$0xff]
    %v54 = vld [vmem:[%s0 + $0xf8] sm:$0xff]
    %v55 = vld [vmem:[%s2] sm:$0xff]
    %v56 = vld [vmem:[%s2 + $0x8] sm:$0xff]
    %v57 = vld [vmem:[%s2 + $0x10] sm:$0xff]
    %v58 = vld [vmem:[%s2 + $0x18] sm:$0xff]
    %v59 = vld [vmem:[%s2 + $0x20] sm:$0xff]
    %v60 = vld [vmem:[%s2 + $0x28] sm:$0xff]
    %v61 = vld [vmem:[%s2 + $0x30] sm:$0xff]
    %v62 = vld [vmem:[%s2 + $0x38] sm:$0xff]
    %v63 = vld [vmem:[%s2 + $0x40] sm:$0xff]
    %v64 = vld [vmem:[%s2 + $0x48] sm:$0xff]
    %v65 = vld [vmem:[%s2 + $0x50] sm:$0xff]
    %v66 = vld [vmem:[%s2 + $0x58] sm:$0xff]
    %v67 = vld [vmem:[%s2 + $0x60] sm:$0xff]
    %v68 = vld [vmem:[%s2 + $0x68] sm:$0xff]
    %v69 = vld [vmem:[%s2 + $0x70] sm:$0xff]
    %v70 = vld [vmem:[%s2 + $0x78] sm:$0xff]
    %v71 = vld [vmem:[%s2 + $0x80] sm:$0xff]
    %v72 = vld [vmem:[%s2 + $0x88] sm:$0xff]
    %v73 = vld [vmem:[%s2 + $0x90] sm:$0xff]
    %v74 = vld [vmem:[%s2 + $0x98] sm:$0xff]
    %v75 = vld [vmem:[%s2 + $0xa0] sm:$0xff]
    %v76 = vld [vmem:[%s2 + $0xa8] sm:$0xff]
    %v77 = vld [vmem:[%s2 + $0xb0] sm:$0xff]
    %v78 = vld [vmem:[%s2 + $0xb8] sm:$0xff]
    %v79 = vld [vmem:[%s2 + $0xc0] sm:$0xff]
    %v80 = vld [vmem:[%s2 + $0xc8] sm:$0xff]
    %v81 = vld [vmem:[%s2 + $0xd0] sm:$0xff]
    %v82 = vld [vmem:[%s2 + $0xd8] sm:$0xff]
    %v83 = vld [vmem:[%s2 + $0xe0] sm:$0xff]
    %v84 = vld [vmem:[%s2 + $0xe8] sm:$0xff]
    %v85 = vld [vmem:[%s2 + $0xf0] sm:$0xff]
    %v86 = vld [vmem:[%s2 + $0xf8] sm:$0xff]
    %v87 = vld [vmem:[%s3] sm:$0x3]
    %v89 = vlaneseq
    %v90 = vshrl.u32 %v89, 7
    %v91 = vsub.s32 0, %v90
    %v92 = vrot.slane %v87, %v91
    %v93 = vlaneseq
    %v94 = vshrl.u32 %v93, 7
    %v95 = vsub.s32 1, %v94
    %v96 = vrot.slane %v87, %v95
    %v131 = vunpack.c.l.b16 %v23
    %v132 = vunpack.c.h.b16 %v23
    %v133 = vunpack.c.l.b16 %v24
    %v134 = vunpack.c.h.b16 %v24
    %v135 = vunpack.c.l.b16 %v25
    %v136 = vunpack.c.h.b16 %v25
    %v137 = vunpack.c.l.b16 %v26
    %v138 = vunpack.c.h.b16 %v26
    %v139 = vunpack.c.l.b16 %v27
    %v140 = vunpack.c.h.b16 %v27
    %v141 = vunpack.c.l.b16 %v28
    %v142 = vunpack.c.h.b16 %v28
    %v143 = vunpack.c.l.b16 %v29
    %v144 = vunpack.c.h.b16 %v29
    %v145 = vunpack.c.l.b16 %v30
    %v146 = vunpack.c.h.b16 %v30
    %v147 = vunpack.c.l.b16 %v31
    %v148 = vunpack.c.h.b16 %v31
    %v149 = vunpack.c.l.b16 %v32
    %v150 = vunpack.c.h.b16 %v32
    %v151 = vunpack.c.l.b16 %v33
    %v152 = vunpack.c.h.b16 %v33
    %v153 = vunpack.c.l.b16 %v34
    %v154 = vunpack.c.h.b16 %v34
    %v155 = vunpack.c.l.b16 %v35
    %v156 = vunpack.c.h.b16 %v35
    %v157 = vunpack.c.l.b16 %v36
    %v158 = vunpack.c.h.b16 %v36
    %v159 = vunpack.c.l.b16 %v37
    %v160 = vunpack.c.h.b16 %v37
    %v161 = vunpack.c.l.b16 %v38
    %v162 = vunpack.c.h.b16 %v38
    %v163 = vunpack.c.l.b16 %v39
    %v164 = vunpack.c.h.b16 %v39
    %v165 = vunpack.c.l.b16 %v40
    %v166 = vunpack.c.h.b16 %v40
    %v167 = vunpack.c.l.b16 %v41
    %v168 = vunpack.c.h.b16 %v41
    %v169 = vunpack.c.l.b16 %v42
    %v170 = vunpack.c.h.b16 %v42
    %v171 = vunpack.c.l.b16 %v43
    %v172 = vunpack.c.h.b16 %v43
    %v173 = vunpack.c.l.b16 %v44
    %v174 = vunpack.c.h.b16 %v44
    %v175 = vunpack.c.l.b16 %v45
    %v176 = vunpack.c.h.b16 %v45
    %v177 = vunpack.c.l.b16 %v46
    %v178 = vunpack.c.h.b16 %v46
    %v179 = vunpack.c.l.b16 %v47
    %v180 = vunpack.c.h.b16 %v47
    %v181 = vunpack.c.l.b16 %v48
    %v182 = vunpack.c.h.b16 %v48
    %v183 = vunpack.c.l.b16 %v49
    %v184 = vunpack.c.h.b16 %v49
    %v185 = vunpack.c.l.b16 %v50
    %v186 = vunpack.c.h.b16 %v50
    %v187 = vunpack.c.l.b16 %v51
    %v188 = vunpack.c.h.b16 %v51
    %v189 = vunpack.c.l.b16 %v52
    %v190 = vunpack.c.h.b16 %v52
    %v191 = vunpack.c.l.b16 %v53
    %v192 = vunpack.c.h.b16 %v53
    %v193 = vunpack.c.l.b16 %v54
    %v194 = vunpack.c.h.b16 %v54
    %v195 = vpack.c.b16 %v133, %v131
    %v196 = vpack.c.b16 %v134, %v132
    %v197 = vpack.c.b16 %v137, %v135
    %v198 = vpack.c.b16 %v138, %v136
    %v199 = vpack.c.b16 %v141, %v139
    %v200 = vpack.c.b16 %v142, %v140
    %v201 = vpack.c.b16 %v145, %v143
    %v202 = vpack.c.b16 %v146, %v144
    %v203 = vpack.c.b16 %v149, %v147
    %v204 = vpack.c.b16 %v150, %v148
    %v205 = vpack.c.b16 %v153, %v151
    %v206 = vpack.c.b16 %v154, %v152
    %v207 = vpack.c.b16 %v157, %v155
    %v208 = vpack.c.b16 %v158, %v156
    %v209 = vpack.c.b16 %v161, %v159
    %v210 = vpack.c.b16 %v162, %v160
    %v211 = vpack.c.b16 %v165, %v163
    %v212 = vpack.c.b16 %v166, %v164
    %v213 = vpack.c.b16 %v169, %v167
    %v214 = vpack.c.b16 %v170, %v168
    %v215 = vpack.c.b16 %v173, %v171
    %v216 = vpack.c.b16 %v174, %v172
    %v217 = vpack.c.b16 %v177, %v175
    %v218 = vpack.c.b16 %v178, %v176
    %v219 = vpack.c.b16 %v181, %v179
    %v220 = vpack.c.b16 %v182, %v180
    %v221 = vpack.c.b16 %v185, %v183
    %v222 = vpack.c.b16 %v186, %v184
    %v223 = vpack.c.b16 %v189, %v187
    %v224 = vpack.c.b16 %v190, %v188
    %v225 = vpack.c.b16 %v193, %v191
    %v226 = vpack.c.b16 %v194, %v192
    %v291 = vunpack.c.l.b16 %v55
    %v292 = vunpack.c.h.b16 %v55
    %v293 = vunpack.c.l.b16 %v56
    %v294 = vunpack.c.h.b16 %v56
    %v295 = vunpack.c.l.b16 %v57
    %v296 = vunpack.c.h.b16 %v57
    %v297 = vunpack.c.l.b16 %v58
    %v298 = vunpack.c.h.b16 %v58
    %v299 = vunpack.c.l.b16 %v59
    %v300 = vunpack.c.h.b16 %v59
    %v301 = vunpack.c.l.b16 %v60
    %v302 = vunpack.c.h.b16 %v60
    %v303 = vunpack.c.l.b16 %v61
    %v304 = vunpack.c.h.b16 %v61
    %v305 = vunpack.c.l.b16 %v62
    %v306 = vunpack.c.h.b16 %v62
    %v307 = vunpack.c.l.b16 %v63
    %v308 = vunpack.c.h.b16 %v63
    %v309 = vunpack.c.l.b16 %v64
    %v310 = vunpack.c.h.b16 %v64
    %v311 = vunpack.c.l.b16 %v65
    %v312 = vunpack.c.h.b16 %v65
    %v313 = vunpack.c.l.b16 %v66
    %v314 = vunpack.c.h.b16 %v66
    %v315 = vunpack.c.l.b16 %v67
    %v316 = vunpack.c.h.b16 %v67
    %v317 = vunpack.c.l.b16 %v68
    %v318 = vunpack.c.h.b16 %v68
    %v319 = vunpack.c.l.b16 %v69
    %v320 = vunpack.c.h.b16 %v69
    %v321 = vunpack.c.l.b16 %v70
    %v322 = vunpack.c.h.b16 %v70
    %v323 = vunpack.c.l.b16 %v71
    %v324 = vunpack.c.h.b16 %v71
    %v325 = vunpack.c.l.b16 %v72
    %v326 = vunpack.c.h.b16 %v72
    %v327 = vunpack.c.l.b16 %v73
    %v328 = vunpack.c.h.b16 %v73
    %v329 = vunpack.c.l.b16 %v74
    %v330 = vunpack.c.h.b16 %v74
    %v331 = vunpack.c.l.b16 %v75
    %v332 = vunpack.c.h.b16 %v75
    %v333 = vunpack.c.l.b16 %v76
    %v334 = vunpack.c.h.b16 %v76
    %v335 = vunpack.c.l.b16 %v77
    %v336 = vunpack.c.h.b16 %v77
    %v337 = vunpack.c.l.b16 %v78
    %v338 = vunpack.c.h.b16 %v78
    %v339 = vunpack.c.l.b16 %v79
    %v340 = vunpack.c.h.b16 %v79
    %v341 = vunpack.c.l.b16 %v80
    %v342 = vunpack.c.h.b16 %v80
    %v343 = vunpack.c.l.b16 %v81
    %v344 = vunpack.c.h.b16 %v81
    %v345 = vunpack.c.l.b16 %v82
    %v346 = vunpack.c.h.b16 %v82
    %v347 = vunpack.c.l.b16 %v83
    %v348 = vunpack.c.h.b16 %v83
    %v349 = vunpack.c.l.b16 %v84
    %v350 = vunpack.c.h.b16 %v84
    %v351 = vunpack.c.l.b16 %v85
    %v352 = vunpack.c.h.b16 %v85
    %v353 = vunpack.c.l.b16 %v86
    %v354 = vunpack.c.h.b16 %v86
    %v355 = vpack.c.b16 %v293, %v291
    %v356 = vpack.c.b16 %v294, %v292
    %v357 = vpack.c.b16 %v297, %v295
    %v358 = vpack.c.b16 %v298, %v296
    %v359 = vpack.c.b16 %v301, %v299
    %v360 = vpack.c.b16 %v302, %v300
    %v361 = vpack.c.b16 %v305, %v303
    %v362 = vpack.c.b16 %v306, %v304
    %v363 = vpack.c.b16 %v309, %v307
    %v364 = vpack.c.b16 %v310, %v308
    %v365 = vpack.c.b16 %v313, %v311
    %v366 = vpack.c.b16 %v314, %v312
    %v367 = vpack.c.b16 %v317, %v315
    %v368 = vpack.c.b16 %v318, %v316
    %v369 = vpack.c.b16 %v321, %v319
    %v370 = vpack.c.b16 %v322, %v320
    %v371 = vpack.c.b16 %v325, %v323
    %v372 = vpack.c.b16 %v326, %v324
    %v373 = vpack.c.b16 %v329, %v327
    %v374 = vpack.c.b16 %v330, %v328
    %v375 = vpack.c.b16 %v333, %v331
    %v376 = vpack.c.b16 %v334, %v332
    %v377 = vpack.c.b16 %v337, %v335
    %v378 = vpack.c.b16 %v338, %v336
    %v379 = vpack.c.b16 %v341, %v339
    %v380 = vpack.c.b16 %v342, %v340
    %v381 = vpack.c.b16 %v345, %v343
    %v382 = vpack.c.b16 %v346, %v344
    %v383 = vpack.c.b16 %v349, %v347
    %v384 = vpack.c.b16 %v350, %v348
    %v385 = vpack.c.b16 %v353, %v351
    %v386 = vpack.c.b16 %v354, %v352
    %419 = vmatprep.subr.bf16.mxu0 %v356
    %420 = vmatpush1.bf16.msra.mxu0 %v355
    %421 = vmatprep.subr.bf16.mxu0 %v358
    %422 = vmatpush1.bf16.msra.mxu0 %v357
    %423 = vmatprep.subr.bf16.mxu0 %v360
    %424 = vmatpush1.bf16.msra.mxu0 %v359
    %425 = vmatprep.subr.bf16.mxu0 %v362
    %426 = vmatpush1.bf16.msra.mxu0 %v361
    %427 = vmatprep.subr.bf16.mxu0 %v364
    %428 = vmatpush1.bf16.msra.mxu0 %v363
    %429 = vmatprep.subr.bf16.mxu0 %v366
    %430 = vmatpush1.bf16.msra.mxu0 %v365
    %431 = vmatprep.subr.bf16.mxu0 %v368
    %432 = vmatpush1.bf16.msra.mxu0 %v367
    %433 = vmatprep.subr.bf16.mxu0 %v370
    %434 = vmatpush1.bf16.msra.mxu0 %v369
    %435 = vmatprep.subr.bf16.mxu0 %v372
    %436 = vmatpush1.bf16.msra.mxu0 %v371
    %437 = vmatprep.subr.bf16.mxu0 %v374
    %438 = vmatpush1.bf16.msra.mxu0 %v373
    %439 = vmatprep.subr.bf16.mxu0 %v376
    %440 = vmatpush1.bf16.msra.mxu0 %v375
    %441 = vmatprep.subr.bf16.mxu0 %v378
    %442 = vmatpush1.bf16.msra.mxu0 %v377
    %443 = vmatprep.subr.bf16.mxu0 %v380
    %444 = vmatpush1.bf16.msra.mxu0 %v379
    %445 = vmatprep.subr.bf16.mxu0 %v382
    %446 = vmatpush1.bf16.msra.mxu0 %v381
    %447 = vmatprep.subr.bf16.mxu0 %v384
    %448 = vmatpush1.bf16.msra.mxu0 %v383
    %449 = vmatprep.subr.bf16.mxu0 %v386
    %450 = vmatpush1.bf16.msra.mxu0 %v385
    %451 = vmatprep.mubr.bf16.mxu0 %v196
    %452 = vmatmul.mubr.bf16.gmra.mrb[0].mxu0 %v195
    %v453 = vpop.f32.mrb[0].mxu0
    %v454 = vadd.f32 %v92, %v453
    %v455 = vpop.f32.mrb[0].mxu0
    %v456 = vadd.f32 %v96, %v455
    %v457 = vpop.f32.mrb[0].mxu0
    %v458 = vadd.f32 %v92, %v457
    %v459 = vpop.f32.mrb[0].mxu0
    %v460 = vadd.f32 %v96, %v459
    %461 = vmatprep.mubr.bf16.mxu0 %v198
    %462 = vmatmul.mubr.bf16.gmra.mrb[0].mxu0 %v197
    %v463 = vpop.f32.mrb[0].mxu0
    %v464 = vadd.f32 %v92, %v463
    %v465 = vpop.f32.mrb[0].mxu0
    %v466 = vadd.f32 %v96, %v465
    %v467 = vpop.f32.mrb[0].mxu0
    %v468 = vadd.f32 %v92, %v467
    %v469 = vpop.f32.mrb[0].mxu0
    %v470 = vadd.f32 %v96, %v469
    %471 = vmatprep.mubr.bf16.mxu0 %v200
    %472 = vmatmul.mubr.bf16.gmra.mrb[0].mxu0 %v199
    %v473 = vpop.f32.mrb[0].mxu0
    %v474 = vadd.f32 %v92, %v473
    %v475 = vpop.f32.mrb[0].mxu0
    %v476 = vadd.f32 %v96, %v475
    %v477 = vpop.f32.mrb[0].mxu0
    %v478 = vadd.f32 %v92, %v477
    %v479 = vpop.f32.mrb[0].mxu0
    %v480 = vadd.f32 %v96, %v479
    %481 = vmatprep.mubr.bf16.mxu0 %v202
    %482 = vmatmul.mubr.bf16.gmra.mrb[0].mxu0 %v201
    %v483 = vpop.f32.mrb[0].mxu0
    %v484 = vadd.f32 %v92, %v483
    %v485 = vpop.f32.mrb[0].mxu0
    %v486 = vadd.f32 %v96, %v485
    %v487 = vpop.f32.mrb[0].mxu0
    %v488 = vadd.f32 %v92, %v487
    %v489 = vpop.f32.mrb[0].mxu0
    %v490 = vadd.f32 %v96, %v489
    %491 = vmatprep.mubr.bf16.mxu0 %v204
    %492 = vmatmul.mubr.bf16.gmra.mrb[0].mxu0 %v203
    %v493 = vpop.f32.mrb[0].mxu0
    %v494 = vadd.f32 %v92, %v493
    %v495 = vpop.f32.mrb[0].mxu0
    %v496 = vadd.f32 %v96, %v495
    %v497 = vpop.f32.mrb[0].mxu0
    %v498 = vadd.f32 %v92, %v497
    %v499 = vpop.f32.mrb[0].mxu0
    %v500 = vadd.f32 %v96, %v499
    %501 = vmatprep.mubr.bf16.mxu0 %v206
    %502 = vmatmul.mubr.bf16.gmra.mrb[0].mxu0 %v205
    %v503 = vpop.f32.mrb[0].mxu0
    %v504 = vadd.f32 %v92, %v503
    %v505 = vpop.f32.mrb[0].mxu0
    %v506 = vadd.f32 %v96, %v505
    %v507 = vpop.f32.mrb[0].mxu0
    %v508 = vadd.f32 %v92, %v507
    %v509 = vpop.f32.mrb[0].mxu0
    %v510 = vadd.f32 %v96, %v509
    %511 = vmatprep.mubr.bf16.mxu0 %v208
    %512 = vmatmul.mubr.bf16.gmra.mrb[0].mxu0 %v207
    %v513 = vpop.f32.mrb[0].mxu0
    %v514 = vadd.f32 %v92, %v513
    %v515 = vpop.f32.mrb[0].mxu0
    %v516 = vadd.f32 %v96, %v515
    %v517 = vpop.f32.mrb[0].mxu0
    %v518 = vadd.f32 %v92, %v517
    %v519 = vpop.f32.mrb[0].mxu0
    %v520 = vadd.f32 %v96, %v519
    %521 = vmatprep.mubr.bf16.mxu0 %v210
    %522 = vmatmul.mubr.bf16.gmra.mrb[0].mxu0 %v209
    %v523 = vpop.f32.mrb[0].mxu0
    %v524 = vadd.f32 %v92, %v523
    %v525 = vpop.f32.mrb[0].mxu0
    %v526 = vadd.f32 %v96, %v525
    %v527 = vpop.f32.mrb[0].mxu0
    %v528 = vadd.f32 %v92, %v527
    %v529 = vpop.f32.mrb[0].mxu0
    %v530 = vadd.f32 %v96, %v529
    %531 = vmatprep.mubr.bf16.mxu0 %v212
    %532 = vmatmul.mubr.bf16.gmra.mrb[0].mxu0 %v211
    %v533 = vpop.f32.mrb[0].mxu0
    %v534 = vadd.f32 %v92, %v533
    %v535 = vpop.f32.mrb[0].mxu0
    %v536 = vadd.f32 %v96, %v535
    %v537 = vpop.f32.mrb[0].mxu0
    %v538 = vadd.f32 %v92, %v537
    %v539 = vpop.f32.mrb[0].mxu0
    %v540 = vadd.f32 %v96, %v539
    %541 = vmatprep.mubr.bf16.mxu0 %v214
    %542 = vmatmul.mubr.bf16.gmra.mrb[0].mxu0 %v213
    %v543 = vpop.f32.mrb[0].mxu0
    %v544 = vadd.f32 %v92, %v543
    %v545 = vpop.f32.mrb[0].mxu0
    %v546 = vadd.f32 %v96, %v545
    %v547 = vpop.f32.mrb[0].mxu0
    %v548 = vadd.f32 %v92, %v547
    %v549 = vpop.f32.mrb[0].mxu0
    %v550 = vadd.f32 %v96, %v549
    %551 = vmatprep.mubr.bf16.mxu0 %v216
    %552 = vmatmul.mubr.bf16.gmra.mrb[0].mxu0 %v215
    %v553 = vpop.f32.mrb[0].mxu0
    %v554 = vadd.f32 %v92, %v553
    %v555 = vpop.f32.mrb[0].mxu0
    %v556 = vadd.f32 %v96, %v555
    %v557 = vpop.f32.mrb[0].mxu0
    %v558 = vadd.f32 %v92, %v557
    %v559 = vpop.f32.mrb[0].mxu0
    %v560 = vadd.f32 %v96, %v559
    %561 = vmatprep.mubr.bf16.mxu0 %v218
    %562 = vmatmul.mubr.bf16.gmra.mrb[0].mxu0 %v217
    %v563 = vpop.f32.mrb[0].mxu0
    %v564 = vadd.f32 %v92, %v563
    %v565 = vpop.f32.mrb[0].mxu0
    %v566 = vadd.f32 %v96, %v565
    %v567 = vpop.f32.mrb[0].mxu0
    %v568 = vadd.f32 %v92, %v567
    %v569 = vpop.f32.mrb[0].mxu0
    %v570 = vadd.f32 %v96, %v569
    %571 = vmatprep.mubr.bf16.mxu0 %v220
    %572 = vmatmul.mubr.bf16.gmra.mrb[0].mxu0 %v219
    %v573 = vpop.f32.mrb[0].mxu0
    %v574 = vadd.f32 %v92, %v573
    %v575 = vpop.f32.mrb[0].mxu0
    %v576 = vadd.f32 %v96, %v575
    %v577 = vpop.f32.mrb[0].mxu0
    %v578 = vadd.f32 %v92, %v577
    %v579 = vpop.f32.mrb[0].mxu0
    %v580 = vadd.f32 %v96, %v579
    %581 = vmatprep.mubr.bf16.mxu0 %v222
    %582 = vmatmul.mubr.bf16.gmra.mrb[0].mxu0 %v221
    %v583 = vpop.f32.mrb[0].mxu0
    %v584 = vadd.f32 %v92, %v583
    %v585 = vpop.f32.mrb[0].mxu0
    %v586 = vadd.f32 %v96, %v585
    %v587 = vpop.f32.mrb[0].mxu0
    %v588 = vadd.f32 %v92, %v587
    %v589 = vpop.f32.mrb[0].mxu0
    %v590 = vadd.f32 %v96, %v589
    %591 = vmatprep.mubr.bf16.mxu0 %v224
    %592 = vmatmul.mubr.bf16.gmra.mrb[0].mxu0 %v223
    %v593 = vpop.f32.mrb[0].mxu0
    %v594 = vadd.f32 %v92, %v593
    %v595 = vpop.f32.mrb[0].mxu0
    %v596 = vadd.f32 %v96, %v595
    %v597 = vpop.f32.mrb[0].mxu0
    %v598 = vadd.f32 %v92, %v597
    %v599 = vpop.f32.mrb[0].mxu0
    %v600 = vadd.f32 %v96, %v599
    %601 = vmatprep.mubr.bf16.mxu0 %v226
    %602 = vmatmul.mubr.bf16.gmra.mrb[0].mxu0 %v225
    %v603 = vpop.f32.mrb[0].mxu0
    %v604 = vadd.f32 %v92, %v603
    %v605 = vpop.f32.mrb[0].mxu0
    %v606 = vadd.f32 %v96, %v605
    %v607 = vpop.f32.mrb[0].mxu0
    %v608 = vadd.f32 %v92, %v607
    %v609 = vpop.f32.mrb[0].mxu0
    %v610 = vadd.f32 %v96, %v609
    %611 = vdwg.mxu0
    %v612 = vld [vmem:[%s1] sm:$0xff]
    %v613 = vld [vmem:[%s1 + $0x8] sm:$0xff]
    %v614 = vld [vmem:[%s1 + $0x10] sm:$0xff]
    %v615 = vld [vmem:[%s1 + $0x18] sm:$0xff]
    %v616 = vld [vmem:[%s1 + $0x20] sm:$0xff]
    %v617 = vld [vmem:[%s1 + $0x28] sm:$0xff]
    %v618 = vld [vmem:[%s1 + $0x30] sm:$0xff]
    %v619 = vld [vmem:[%s1 + $0x38] sm:$0xff]
    %v620 = vld [vmem:[%s1 + $0x40] sm:$0xff]
    %v621 = vld [vmem:[%s1 + $0x48] sm:$0xff]
    %v622 = vld [vmem:[%s1 + $0x50] sm:$0xff]
    %v623 = vld [vmem:[%s1 + $0x58] sm:$0xff]
    %v624 = vld [vmem:[%s1 + $0x60] sm:$0xff]
    %v625 = vld [vmem:[%s1 + $0x68] sm:$0xff]
    %v626 = vld [vmem:[%s1 + $0x70] sm:$0xff]
    %v627 = vld [vmem:[%s1 + $0x78] sm:$0xff]
    %v628 = vld [vmem:[%s1 + $0x80] sm:$0xff]
    %v629 = vld [vmem:[%s1 + $0x88] sm:$0xff]
    %v630 = vld [vmem:[%s1 + $0x90] sm:$0xff]
    %v631 = vld [vmem:[%s1 + $0x98] sm:$0xff]
    %v632 = vld [vmem:[%s1 + $0xa0] sm:$0xff]
    %v633 = vld [vmem:[%s1 + $0xa8] sm:$0xff]
    %v634 = vld [vmem:[%s1 + $0xb0] sm:$0xff]
    %v635 = vld [vmem:[%s1 + $0xb8] sm:$0xff]
    %v636 = vld [vmem:[%s1 + $0xc0] sm:$0xff]
    %v637 = vld [vmem:[%s1 + $0xc8] sm:$0xff]
    %v638 = vld [vmem:[%s1 + $0xd0] sm:$0xff]
    %v639 = vld [vmem:[%s1 + $0xd8] sm:$0xff]
    %v640 = vld [vmem:[%s1 + $0xe0] sm:$0xff]
    %v641 = vld [vmem:[%s1 + $0xe8] sm:$0xff]
    %v642 = vld [vmem:[%s1 + $0xf0] sm:$0xff]
    %v643 = vld [vmem:[%s1 + $0xf8] sm:$0xff]
    %v644 = vunpack.c.l.bf16 %v612
    %v645 = vunpack.c.h.bf16 %v612
    %v646 = vunpack.c.l.bf16 %v613
    %v647 = vunpack.c.h.bf16 %v613
    %v648 = vunpack.c.l.bf16 %v614
    %v649 = vunpack.c.h.bf16 %v614
    %v650 = vunpack.c.l.bf16 %v615
    %v651 = vunpack.c.h.bf16 %v615
    %v652 = vunpack.c.l.bf16 %v616
    %v653 = vunpack.c.h.bf16 %v616
    %v654 = vunpack.c.l.bf16 %v617
    %v655 = vunpack.c.h.bf16 %v617
    %v656 = vunpack.c.l.bf16 %v618
    %v657 = vunpack.c.h.bf16 %v618
    %v658 = vunpack.c.l.bf16 %v619
    %v659 = vunpack.c.h.bf16 %v619
    %v660 = vunpack.c.l.bf16 %v620
    %v661 = vunpack.c.h.bf16 %v620
    %v662 = vunpack.c.l.bf16 %v621
    %v663 = vunpack.c.h.bf16 %v621
    %v664 = vunpack.c.l.bf16 %v622
    %v665 = vunpack.c.h.bf16 %v622
    %v666 = vunpack.c.l.bf16 %v623
    %v667 = vunpack.c.h.bf16 %v623
    %v668 = vunpack.c.l.bf16 %v624
    %v669 = vunpack.c.h.bf16 %v624
    %v670 = vunpack.c.l.bf16 %v625
    %v671 = vunpack.c.h.bf16 %v625
    %v672 = vunpack.c.l.bf16 %v626
    %v673 = vunpack.c.h.bf16 %v626
    %v674 = vunpack.c.l.bf16 %v627
    %v675 = vunpack.c.h.bf16 %v627
    %v676 = vunpack.c.l.bf16 %v628
    %v677 = vunpack.c.h.bf16 %v628
    %v678 = vunpack.c.l.bf16 %v629
    %v679 = vunpack.c.h.bf16 %v629
    %v680 = vunpack.c.l.bf16 %v630
    %v681 = vunpack.c.h.bf16 %v630
    %v682 = vunpack.c.l.bf16 %v631
    %v683 = vunpack.c.h.bf16 %v631
    %v684 = vunpack.c.l.bf16 %v632
    %v685 = vunpack.c.h.bf16 %v632
    %v686 = vunpack.c.l.bf16 %v633
    %v687 = vunpack.c.h.bf16 %v633
    %v688 = vunpack.c.l.bf16 %v634
    %v689 = vunpack.c.h.bf16 %v634
    %v690 = vunpack.c.l.bf16 %v635
    %v691 = vunpack.c.h.bf16 %v635
    %v692 = vunpack.c.l.bf16 %v636
    %v693 = vunpack.c.h.bf16 %v636
    %v694 = vunpack.c.l.bf16 %v637
    %v695 = vunpack.c.h.bf16 %v637
    %v696 = vunpack.c.l.bf16 %v638
    %v697 = vunpack.c.h.bf16 %v638
    %v698 = vunpack.c.l.bf16 %v639
    %v699 = vunpack.c.h.bf16 %v639
    %v700 = vunpack.c.l.bf16 %v640
    %v701 = vunpack.c.h.bf16 %v640
    %v702 = vunpack.c.l.bf16 %v641
    %v703 = vunpack.c.h.bf16 %v641
    %v704 = vunpack.c.l.bf16 %v642
    %v705 = vunpack.c.h.bf16 %v642
    %v706 = vunpack.c.l.bf16 %v643
    %v707 = vunpack.c.h.bf16 %v643
    %v708 = vadd.f32 %v454, %v644
    %v709 = vadd.f32 %v456, %v645
    %v710 = vadd.f32 %v458, %v646
    %v711 = vadd.f32 %v460, %v647
    %v712 = vadd.f32 %v464, %v648
    %v713 = vadd.f32 %v466, %v649
    %v714 = vadd.f32 %v468, %v650
    %v715 = vadd.f32 %v470, %v651
    %v716 = vadd.f32 %v474, %v652
    %v717 = vadd.f32 %v476, %v653
    %v718 = vadd.f32 %v478, %v654
    %v719 = vadd.f32 %v480, %v655
    %v720 = vadd.f32 %v484, %v656
    %v721 = vadd.f32 %v486, %v657
    %v722 = vadd.f32 %v488, %v658
    %v723 = vadd.f32 %v490, %v659
    %v724 = vadd.f32 %v494, %v660
    %v725 = vadd.f32 %v496, %v661
    %v726 = vadd.f32 %v498, %v662
    %v727 = vadd.f32 %v500, %v663
    %v728 = vadd.f32 %v504, %v664
    %v729 = vadd.f32 %v506, %v665
    %v730 = vadd.f32 %v508, %v666
    %v731 = vadd.f32 %v510, %v667
    %v732 = vadd.f32 %v514, %v668
    %v733 = vadd.f32 %v516, %v669
    %v734 = vadd.f32 %v518, %v670
    %v735 = vadd.f32 %v520, %v671
    %v736 = vadd.f32 %v524, %v672
    %v737 = vadd.f32 %v526, %v673
    %v738 = vadd.f32 %v528, %v674
    %v739 = vadd.f32 %v530, %v675
    %v740 = vadd.f32 %v534, %v676
    %v741 = vadd.f32 %v536, %v677
    %v742 = vadd.f32 %v538, %v678
    %v743 = vadd.f32 %v540, %v679
    %v744 = vadd.f32 %v544, %v680
    %v745 = vadd.f32 %v546, %v681
    %v746 = vadd.f32 %v548, %v682
    %v747 = vadd.f32 %v550, %v683
    %v748 = vadd.f32 %v554, %v684
    %v749 = vadd.f32 %v556, %v685
    %v750 = vadd.f32 %v558, %v686
    %v751 = vadd.f32 %v560, %v687
    %v752 = vadd.f32 %v564, %v688
    %v753 = vadd.f32 %v566, %v689
    %v754 = vadd.f32 %v568, %v690
    %v755 = vadd.f32 %v570, %v691
    %v756 = vadd.f32 %v574, %v692
    %v757 = vadd.f32 %v576, %v693
    %v758 = vadd.f32 %v578, %v694
    %v759 = vadd.f32 %v580, %v695
    %v760 = vadd.f32 %v584, %v696
    %v761 = vadd.f32 %v586, %v697
    %v762 = vadd.f32 %v588, %v698
    %v763 = vadd.f32 %v590, %v699
    %v764 = vadd.f32 %v594, %v700
    %v765 = vadd.f32 %v596, %v701
    %v766 = vadd.f32 %v598, %v702
    %v767 = vadd.f32 %v600, %v703
    %v768 = vadd.f32 %v604, %v704
    %v769 = vadd.f32 %v606, %v705
    %v770 = vadd.f32 %v608, %v706
    %v771 = vadd.f32 %v610, %v707
    %v772 = vadd.f32 %v708, %v709
    %773 = vadd.xlane.f32.xlu0 %v772
    %v774 = vpop.xlane.xlu0 %773
    %v775 = vadd.f32 %v710, %v711
    %776 = vadd.xlane.f32.xlu0 %v775
    %v777 = vpop.xlane.xlu0 %776
    %v778 = vadd.f32 %v712, %v713
    %779 = vadd.xlane.f32.xlu0 %v778
    %v780 = vpop.xlane.xlu0 %779
    %v781 = vadd.f32 %v714, %v715
    %782 = vadd.xlane.f32.xlu0 %v781
    %v783 = vpop.xlane.xlu0 %782
    %v784 = vadd.f32 %v716, %v717
    %785 = vadd.xlane.f32.xlu0 %v784
    %v786 = vpop.xlane.xlu0 %785
    %v787 = vadd.f32 %v718, %v719
    %788 = vadd.xlane.f32.xlu0 %v787
    %v789 = vpop.xlane.xlu0 %788
    %v790 = vadd.f32 %v720, %v721
    %791 = vadd.xlane.f32.xlu0 %v790
    %v792 = vpop.xlane.xlu0 %791
    %v793 = vadd.f32 %v722, %v723
    %794 = vadd.xlane.f32.xlu0 %v793
    %v795 = vpop.xlane.xlu0 %794
    %v796 = vadd.f32 %v724, %v725
    %797 = vadd.xlane.f32.xlu0 %v796
    %v798 = vpop.xlane.xlu0 %797
    %v799 = vadd.f32 %v726, %v727
    %800 = vadd.xlane.f32.xlu0 %v799
    %v801 = vpop.xlane.xlu0 %800
    %v802 = vadd.f32 %v728, %v729
    %803 = vadd.xlane.f32.xlu0 %v802
    %v804 = vpop.xlane.xlu0 %803
    %v805 = vadd.f32 %v730, %v731
    %806 = vadd.xlane.f32.xlu0 %v805
    %v807 = vpop.xlane.xlu0 %806
    %v808 = vadd.f32 %v732, %v733
    %809 = vadd.xlane.f32.xlu0 %v808
    %v810 = vpop.xlane.xlu0 %809
    %v811 = vadd.f32 %v734, %v735
    %812 = vadd.xlane.f32.xlu0 %v811
    %v813 = vpop.xlane.xlu0 %812
    %v814 = vadd.f32 %v736, %v737
    %815 = vadd.xlane.f32.xlu0 %v814
    %v816 = vpop.xlane.xlu0 %815
    %v817 = vadd.f32 %v738, %v739
    %818 = vadd.xlane.f32.xlu0 %v817
    %v819 = vpop.xlane.xlu0 %818
    %v820 = vadd.f32 %v740, %v741
    %821 = vadd.xlane.f32.xlu0 %v820
    %v822 = vpop.xlane.xlu0 %821
    %v823 = vadd.f32 %v742, %v743
    %824 = vadd.xlane.f32.xlu0 %v823
    %v825 = vpop.xlane.xlu0 %824
    %v826 = vadd.f32 %v744, %v745
    %827 = vadd.xlane.f32.xlu0 %v826
    %v828 = vpop.xlane.xlu0 %827
    %v829 = vadd.f32 %v746, %v747
    %830 = vadd.xlane.f32.xlu0 %v829
    %v831 = vpop.xlane.xlu0 %830
    %v832 = vadd.f32 %v748, %v749
    %833 = vadd.xlane.f32.xlu0 %v832
    %v834 = vpop.xlane.xlu0 %833
    %v835 = vadd.f32 %v750, %v751
    %836 = vadd.xlane.f32.xlu0 %v835
    %v837 = vpop.xlane.xlu0 %836
    %v838 = vadd.f32 %v752, %v753
    %839 = vadd.xlane.f32.xlu0 %v838
    %v840 = vpop.xlane.xlu0 %839
    %v841 = vadd.f32 %v754, %v755
    %842 = vadd.xlane.f32.xlu0 %v841
    %v843 = vpop.xlane.xlu0 %842
    %v844 = vadd.f32 %v756, %v757
    %845 = vadd.xlane.f32.xlu0 %v844
    %v846 = vpop.xlane.xlu0 %845
    %v847 = vadd.f32 %v758, %v759
    %848 = vadd.xlane.f32.xlu0 %v847
    %v849 = vpop.xlane.xlu0 %848
    %v850 = vadd.f32 %v760, %v761
    %851 = vadd.xlane.f32.xlu0 %v850
    %v852 = vpop.xlane.xlu0 %851
    %v853 = vadd.f32 %v762, %v763
    %854 = vadd.xlane.f32.xlu0 %v853
    %v855 = vpop.xlane.xlu0 %854
    %v856 = vadd.f32 %v764, %v765
    %857 = vadd.xlane.f32.xlu0 %v856
    %v858 = vpop.xlane.xlu0 %857
    %v859 = vadd.f32 %v766, %v767
    %860 = vadd.xlane.f32.xlu0 %v859
    %v861 = vpop.xlane.xlu0 %860
    %v862 = vadd.f32 %v768, %v769
    %863 = vadd.xlane.f32.xlu0 %v862
    %v864 = vpop.xlane.xlu0 %863
    %v865 = vadd.f32 %v770, %v771
    %866 = vadd.xlane.f32.xlu0 %v865
    %v867 = vpop.xlane.xlu0 %866
    %v868 = vrcp.pop 256.0
    %v869 = vmul.f32 %v774, %v868
    %v870 = vmul.f32 %v777, %v868
    %v871 = vmul.f32 %v780, %v868
    %v872 = vmul.f32 %v783, %v868
    %v873 = vmul.f32 %v786, %v868
    %v874 = vmul.f32 %v789, %v868
    %v875 = vmul.f32 %v792, %v868
    %v876 = vmul.f32 %v795, %v868
    %v877 = vmul.f32 %v798, %v868
    %v878 = vmul.f32 %v801, %v868
    %v879 = vmul.f32 %v804, %v868
    %v880 = vmul.f32 %v807, %v868
    %v881 = vmul.f32 %v810, %v868
    %v882 = vmul.f32 %v813, %v868
    %v883 = vmul.f32 %v816, %v868
    %v884 = vmul.f32 %v819, %v868
    %v885 = vmul.f32 %v822, %v868
    %v886 = vmul.f32 %v825, %v868
    %v887 = vmul.f32 %v828, %v868
    %v888 = vmul.f32 %v831, %v868
    %v889 = vmul.f32 %v834, %v868
    %v890 = vmul.f32 %v837, %v868
    %v891 = vmul.f32 %v840, %v868
    %v892 = vmul.f32 %v843, %v868
    %v893 = vmul.f32 %v846, %v868
    %v894 = vmul.f32 %v849, %v868
    %v895 = vmul.f32 %v852, %v868
    %v896 = vmul.f32 %v855, %v868
    %v897 = vmul.f32 %v858, %v868
    %v898 = vmul.f32 %v861, %v868
    %v899 = vmul.f32 %v864, %v868
    %v900 = vmul.f32 %v867, %v868
    %v901 = vsub.f32 %v708, %v869
    %v902 = vsub.f32 %v709, %v869
    %v903 = vsub.f32 %v710, %v870
    %v904 = vsub.f32 %v711, %v870
    %v905 = vsub.f32 %v712, %v871
    %v906 = vsub.f32 %v713, %v871
    %v907 = vsub.f32 %v714, %v872
    %v908 = vsub.f32 %v715, %v872
    %v909 = vsub.f32 %v716, %v873
    %v910 = vsub.f32 %v717, %v873
    %v911 = vsub.f32 %v718, %v874
    %v912 = vsub.f32 %v719, %v874
    %v913 = vsub.f32 %v720, %v875
    %v914 = vsub.f32 %v721, %v875
    %v915 = vsub.f32 %v722, %v876
    %v916 = vsub.f32 %v723, %v876
    %v917 = vsub.f32 %v724, %v877
    %v918 = vsub.f32 %v725, %v877
    %v919 = vsub.f32 %v726, %v878
    %v920 = vsub.f32 %v727, %v878
    %v921 = vsub.f32 %v728, %v879
    %v922 = vsub.f32 %v729, %v879
    %v923 = vsub.f32 %v730, %v880
    %v924 = vsub.f32 %v731, %v880
    %v925 = vsub.f32 %v732, %v881
    %v926 = vsub.f32 %v733, %v881
    %v927 = vsub.f32 %v734, %v882
    %v928 = vsub.f32 %v735, %v882
    %v929 = vsub.f32 %v736, %v883
    %v930 = vsub.f32 %v737, %v883
    %v931 = vsub.f32 %v738, %v884
    %v932 = vsub.f32 %v739, %v884
    %v933 = vsub.f32 %v740, %v885
    %v934 = vsub.f32 %v741, %v885
    %v935 = vsub.f32 %v742, %v886
    %v936 = vsub.f32 %v743, %v886
    %v937 = vsub.f32 %v744, %v887
    %v938 = vsub.f32 %v745, %v887
    %v939 = vsub.f32 %v746, %v888
    %v940 = vsub.f32 %v747, %v888
    %v941 = vsub.f32 %v748, %v889
    %v942 = vsub.f32 %v749, %v889
    %v943 = vsub.f32 %v750, %v890
    %v944 = vsub.f32 %v751, %v890
    %v945 = vsub.f32 %v752, %v891
    %v946 = vsub.f32 %v753, %v891
    %v947 = vsub.f32 %v754, %v892
    %v948 = vsub.f32 %v755, %v892
    %v949 = vsub.f32 %v756, %v893
    %v950 = vsub.f32 %v757, %v893
    %v951 = vsub.f32 %v758, %v894
    %v952 = vsub.f32 %v759, %v894
    %v953 = vsub.f32 %v760, %v895
    %v954 = vsub.f32 %v761, %v895
    %v955 = vsub.f32 %v762, %v896
    %v956 = vsub.f32 %v763, %v896
    %v957 = vsub.f32 %v764, %v897
    %v958 = vsub.f32 %v765, %v897
    %v959 = vsub.f32 %v766, %v898
    %v960 = vsub.f32 %v767, %v898
    %v961 = vsub.f32 %v768, %v899
    %v962 = vsub.f32 %v769, %v899
    %v963 = vsub.f32 %v770, %v900
    %v964 = vsub.f32 %v771, %v900
    %v965 = vmul.f32 %v901, %v901
    %v966 = vmul.f32 %v902, %v902
    %v967 = vmul.f32 %v903, %v903
    %v968 = vmul.f32 %v904, %v904
    %v969 = vmul.f32 %v905, %v905
    %v970 = vmul.f32 %v906, %v906
    %v971 = vmul.f32 %v907, %v907
    %v972 = vmul.f32 %v908, %v908
    %v973 = vmul.f32 %v909, %v909
    %v974 = vmul.f32 %v910, %v910
    %v975 = vmul.f32 %v911, %v911
    %v976 = vmul.f32 %v912, %v912
    %v977 = vmul.f32 %v913, %v913
    %v978 = vmul.f32 %v914, %v914
    %v979 = vmul.f32 %v915, %v915
    %v980 = vmul.f32 %v916, %v916
    %v981 = vmul.f32 %v917, %v917
    %v982 = vmul.f32 %v918, %v918
    %v983 = vmul.f32 %v919, %v919
    %v984 = vmul.f32 %v920, %v920
    %v985 = vmul.f32 %v921, %v921
    %v986 = vmul.f32 %v922, %v922
    %v987 = vmul.f32 %v923, %v923
    %v988 = vmul.f32 %v924, %v924
    %v989 = vmul.f32 %v925, %v925
    %v990 = vmul.f32 %v926, %v926
    %v991 = vmul.f32 %v927, %v927
    %v992 = vmul.f32 %v928, %v928
    %v993 = vmul.f32 %v929, %v929
    %v994 = vmul.f32 %v930, %v930
    %v995 = vmul.f32 %v931, %v931
    %v996 = vmul.f32 %v932, %v932
    %v997 = vmul.f32 %v933, %v933
    %v998 = vmul.f32 %v934, %v934
    %v999 = vmul.f32 %v935, %v935
    %v1000 = vmul.f32 %v936, %v936
    %v1001 = vmul.f32 %v937, %v937
    %v1002 = vmul.f32 %v938, %v938
    %v1003 = vmul.f32 %v939, %v939
    %v1004 = vmul.f32 %v940, %v940
    %v1005 = vmul.f32 %v941, %v941
    %v1006 = vmul.f32 %v942, %v942
    %v1007 = vmul.f32 %v943, %v943
    %v1008 = vmul.f32 %v944, %v944
    %v1009 = vmul.f32 %v945, %v945
    %v1010 = vmul.f32 %v946, %v946
    %v1011 = vmul.f32 %v947, %v947
    %v1012 = vmul.f32 %v948, %v948
    %v1013 = vmul.f32 %v949, %v949
    %v1014 = vmul.f32 %v950, %v950
    %v1015 = vmul.f32 %v951, %v951
    %v1016 = vmul.f32 %v952, %v952
    %v1017 = vmul.f32 %v953, %v953
    %v1018 = vmul.f32 %v954, %v954
    %v1019 = vmul.f32 %v955, %v955
    %v1020 = vmul.f32 %v956, %v956
    %v1021 = vmul.f32 %v957, %v957
    %v1022 = vmul.f32 %v958, %v958
    %v1023 = vmul.f32 %v959, %v959
    %v1024 = vmul.f32 %v960, %v960
    %v1025 = vmul.f32 %v961, %v961
    %v1026 = vmul.f32 %v962, %v962
    %v1027 = vmul.f32 %v963, %v963
    %v1028 = vmul.f32 %v964, %v964
    %v1029 = vadd.f32 %v965, %v966
    %1030 = vadd.xlane.f32.xlu0 %v1029
    %v1031 = vpop.xlane.xlu0 %1030
    %v1032 = vadd.f32 %v967, %v968
    %1033 = vadd.xlane.f32.xlu0 %v1032
    %v1034 = vpop.xlane.xlu0 %1033
    %v1035 = vadd.f32 %v969, %v970
    %1036 = vadd.xlane.f32.xlu0 %v1035
    %v1037 = vpop.xlane.xlu0 %1036
    %v1038 = vadd.f32 %v971, %v972
    %1039 = vadd.xlane.f32.xlu0 %v1038
    %v1040 = vpop.xlane.xlu0 %1039
    %v1041 = vadd.f32 %v973, %v974
    %1042 = vadd.xlane.f32.xlu0 %v1041
    %v1043 = vpop.xlane.xlu0 %1042
    %v1044 = vadd.f32 %v975, %v976
    %1045 = vadd.xlane.f32.xlu0 %v1044
    %v1046 = vpop.xlane.xlu0 %1045
    %v1047 = vadd.f32 %v977, %v978
    %1048 = vadd.xlane.f32.xlu0 %v1047
    %v1049 = vpop.xlane.xlu0 %1048
    %v1050 = vadd.f32 %v979, %v980
    %1051 = vadd.xlane.f32.xlu0 %v1050
    %v1052 = vpop.xlane.xlu0 %1051
    %v1053 = vadd.f32 %v981, %v982
    %1054 = vadd.xlane.f32.xlu0 %v1053
    %v1055 = vpop.xlane.xlu0 %1054
    %v1056 = vadd.f32 %v983, %v984
    %1057 = vadd.xlane.f32.xlu0 %v1056
    %v1058 = vpop.xlane.xlu0 %1057
    %v1059 = vadd.f32 %v985, %v986
    %1060 = vadd.xlane.f32.xlu0 %v1059
    %v1061 = vpop.xlane.xlu0 %1060
    %v1062 = vadd.f32 %v987, %v988
    %1063 = vadd.xlane.f32.xlu0 %v1062
    %v1064 = vpop.xlane.xlu0 %1063
    %v1065 = vadd.f32 %v989, %v990
    %1066 = vadd.xlane.f32.xlu0 %v1065
    %v1067 = vpop.xlane.xlu0 %1066
    %v1068 = vadd.f32 %v991, %v992
    %1069 = vadd.xlane.f32.xlu0 %v1068
    %v1070 = vpop.xlane.xlu0 %1069
    %v1071 = vadd.f32 %v993, %v994
    %1072 = vadd.xlane.f32.xlu0 %v1071
    %v1073 = vpop.xlane.xlu0 %1072
    %v1074 = vadd.f32 %v995, %v996
    %1075 = vadd.xlane.f32.xlu0 %v1074
    %v1076 = vpop.xlane.xlu0 %1075
    %v1077 = vadd.f32 %v997, %v998
    %1078 = vadd.xlane.f32.xlu0 %v1077
    %v1079 = vpop.xlane.xlu0 %1078
    %v1080 = vadd.f32 %v999, %v1000
    %1081 = vadd.xlane.f32.xlu0 %v1080
    %v1082 = vpop.xlane.xlu0 %1081
    %v1083 = vadd.f32 %v1001, %v1002
    %1084 = vadd.xlane.f32.xlu0 %v1083
    %v1085 = vpop.xlane.xlu0 %1084
    %v1086 = vadd.f32 %v1003, %v1004
    %1087 = vadd.xlane.f32.xlu0 %v1086
    %v1088 = vpop.xlane.xlu0 %1087
    %v1089 = vadd.f32 %v1005, %v1006
    %1090 = vadd.xlane.f32.xlu0 %v1089
    %v1091 = vpop.xlane.xlu0 %1090
    %v1092 = vadd.f32 %v1007, %v1008
    %1093 = vadd.xlane.f32.xlu0 %v1092
    %v1094 = vpop.xlane.xlu0 %1093
    %v1095 = vadd.f32 %v1009, %v1010
    %1096 = vadd.xlane.f32.xlu0 %v1095
    %v1097 = vpop.xlane.xlu0 %1096
    %v1098 = vadd.f32 %v1011, %v1012
    %1099 = vadd.xlane.f32.xlu0 %v1098
    %v1100 = vpop.xlane.xlu0 %1099
    %v1101 = vadd.f32 %v1013, %v1014
    %1102 = vadd.xlane.f32.xlu0 %v1101
    %v1103 = vpop.xlane.xlu0 %1102
    %v1104 = vadd.f32 %v1015, %v1016
    %1105 = vadd.xlane.f32.xlu0 %v1104
    %v1106 = vpop.xlane.xlu0 %1105
    %v1107 = vadd.f32 %v1017, %v1018
    %1108 = vadd.xlane.f32.xlu0 %v1107
    %v1109 = vpop.xlane.xlu0 %1108
    %v1110 = vadd.f32 %v1019, %v1020
    %1111 = vadd.xlane.f32.xlu0 %v1110
    %v1112 = vpop.xlane.xlu0 %1111
    %v1113 = vadd.f32 %v1021, %v1022
    %1114 = vadd.xlane.f32.xlu0 %v1113
    %v1115 = vpop.xlane.xlu0 %1114
    %v1116 = vadd.f32 %v1023, %v1024
    %1117 = vadd.xlane.f32.xlu0 %v1116
    %v1118 = vpop.xlane.xlu0 %1117
    %v1119 = vadd.f32 %v1025, %v1026
    %1120 = vadd.xlane.f32.xlu0 %v1119
    %v1121 = vpop.xlane.xlu0 %1120
    %v1122 = vadd.f32 %v1027, %v1028
    %1123 = vadd.xlane.f32.xlu0 %v1122
    %v1124 = vpop.xlane.xlu0 %1123
    %v1125 = vmul.f32 %v1031, %v868
    %v1126 = vmul.f32 %v1034, %v868
    %v1127 = vmul.f32 %v1037, %v868
    %v1128 = vmul.f32 %v1040, %v868
    %v1129 = vmul.f32 %v1043, %v868
    %v1130 = vmul.f32 %v1046, %v868
    %v1131 = vmul.f32 %v1049, %v868
    %v1132 = vmul.f32 %v1052, %v868
    %v1133 = vmul.f32 %v1055, %v868
    %v1134 = vmul.f32 %v1058, %v868
    %v1135 = vmul.f32 %v1061, %v868
    %v1136 = vmul.f32 %v1064, %v868
    %v1137 = vmul.f32 %v1067, %v868
    %v1138 = vmul.f32 %v1070, %v868
    %v1139 = vmul.f32 %v1073, %v868
    %v1140 = vmul.f32 %v1076, %v868
    %v1141 = vmul.f32 %v1079, %v868
    %v1142 = vmul.f32 %v1082, %v868
    %v1143 = vmul.f32 %v1085, %v868
    %v1144 = vmul.f32 %v1088, %v868
    %v1145 = vmul.f32 %v1091, %v868
    %v1146 = vmul.f32 %v1094, %v868
    %v1147 = vmul.f32 %v1097, %v868
    %v1148 = vmul.f32 %v1100, %v868
    %v1149 = vmul.f32 %v1103, %v868
    %v1150 = vmul.f32 %v1106, %v868
    %v1151 = vmul.f32 %v1109, %v868
    %v1152 = vmul.f32 %v1112, %v868
    %v1153 = vmul.f32 %v1115, %v868
    %v1154 = vmul.f32 %v1118, %v868
    %v1155 = vmul.f32 %v1121, %v868
    %v1156 = vmul.f32 %v1124, %v868
    %v1157 = vadd.f32 %v1125, 1e-12
    %v1158 = vadd.f32 %v1126, 1e-12
    %v1159 = vadd.f32 %v1127, 1e-12
    %v1160 = vadd.f32 %v1128, 1e-12
    %v1161 = vadd.f32 %v1129, 1e-12
    %v1162 = vadd.f32 %v1130, 1e-12
    %v1163 = vadd.f32 %v1131, 1e-12
    %v1164 = vadd.f32 %v1132, 1e-12
    %v1165 = vadd.f32 %v1133, 1e-12
    %v1166 = vadd.f32 %v1134, 1e-12
    %v1167 = vadd.f32 %v1135, 1e-12
    %v1168 = vadd.f32 %v1136, 1e-12
    %v1169 = vadd.f32 %v1137, 1e-12
    %v1170 = vadd.f32 %v1138, 1e-12
    %v1171 = vadd.f32 %v1139, 1e-12
    %v1172 = vadd.f32 %v1140, 1e-12
    %v1173 = vadd.f32 %v1141, 1e-12
    %v1174 = vadd.f32 %v1142, 1e-12
    %v1175 = vadd.f32 %v1143, 1e-12
    %v1176 = vadd.f32 %v1144, 1e-12
    %v1177 = vadd.f32 %v1145, 1e-12
    %v1178 = vadd.f32 %v1146, 1e-12
    %v1179 = vadd.f32 %v1147, 1e-12
    %v1180 = vadd.f32 %v1148, 1e-12
    %v1181 = vadd.f32 %v1149, 1e-12
    %v1182 = vadd.f32 %v1150, 1e-12
    %v1183 = vadd.f32 %v1151, 1e-12
    %v1184 = vadd.f32 %v1152, 1e-12
    %v1185 = vadd.f32 %v1153, 1e-12
    %v1186 = vadd.f32 %v1154, 1e-12
    %v1187 = vadd.f32 %v1155, 1e-12
    %v1188 = vadd.f32 %v1156, 1e-12
    %v1189 = vrsqrt.pop %v1157
    %v1190 = vrsqrt.pop %v1158
    %v1191 = vrsqrt.pop %v1159
    %v1192 = vrsqrt.pop %v1160
    %v1193 = vrsqrt.pop %v1161
    %v1194 = vrsqrt.pop %v1162
    %v1195 = vrsqrt.pop %v1163
    %v1196 = vrsqrt.pop %v1164
    %v1197 = vrsqrt.pop %v1165
    %v1198 = vrsqrt.pop %v1166
    %v1199 = vrsqrt.pop %v1167
    %v1200 = vrsqrt.pop %v1168
    %v1201 = vrsqrt.pop %v1169
    %v1202 = vrsqrt.pop %v1170
    %v1203 = vrsqrt.pop %v1171
    %v1204 = vrsqrt.pop %v1172
    %v1205 = vrsqrt.pop %v1173
    %v1206 = vrsqrt.pop %v1174
    %v1207 = vrsqrt.pop %v1175
    %v1208 = vrsqrt.pop %v1176
    %v1209 = vrsqrt.pop %v1177
    %v1210 = vrsqrt.pop %v1178
    %v1211 = vrsqrt.pop %v1179
    %v1212 = vrsqrt.pop %v1180
    %v1213 = vrsqrt.pop %v1181
    %v1214 = vrsqrt.pop %v1182
    %v1215 = vrsqrt.pop %v1183
    %v1216 = vrsqrt.pop %v1184
    %v1217 = vrsqrt.pop %v1185
    %v1218 = vrsqrt.pop %v1186
    %v1219 = vrsqrt.pop %v1187
    %v1220 = vrsqrt.pop %v1188
    %v1221 = vmul.f32 %v901, %v1189
    %v1222 = vmul.f32 %v902, %v1189
    %v1223 = vmul.f32 %v903, %v1190
    %v1224 = vmul.f32 %v904, %v1190
    %v1225 = vmul.f32 %v905, %v1191
    %v1226 = vmul.f32 %v906, %v1191
    %v1227 = vmul.f32 %v907, %v1192
    %v1228 = vmul.f32 %v908, %v1192
    %v1229 = vmul.f32 %v909, %v1193
    %v1230 = vmul.f32 %v910, %v1193
    %v1231 = vmul.f32 %v911, %v1194
    %v1232 = vmul.f32 %v912, %v1194
    %v1233 = vmul.f32 %v913, %v1195
    %v1234 = vmul.f32 %v914, %v1195
    %v1235 = vmul.f32 %v915, %v1196
    %v1236 = vmul.f32 %v916, %v1196
    %v1237 = vmul.f32 %v917, %v1197
    %v1238 = vmul.f32 %v918, %v1197
    %v1239 = vmul.f32 %v919, %v1198
    %v1240 = vmul.f32 %v920, %v1198
    %v1241 = vmul.f32 %v921, %v1199
    %v1242 = vmul.f32 %v922, %v1199
    %v1243 = vmul.f32 %v923, %v1200
    %v1244 = vmul.f32 %v924, %v1200
    %v1245 = vmul.f32 %v925, %v1201
    %v1246 = vmul.f32 %v926, %v1201
    %v1247 = vmul.f32 %v927, %v1202
    %v1248 = vmul.f32 %v928, %v1202
    %v1249 = vmul.f32 %v929, %v1203
    %v1250 = vmul.f32 %v930, %v1203
    %v1251 = vmul.f32 %v931, %v1204
    %v1252 = vmul.f32 %v932, %v1204
    %v1253 = vmul.f32 %v933, %v1205
    %v1254 = vmul.f32 %v934, %v1205
    %v1255 = vmul.f32 %v935, %v1206
    %v1256 = vmul.f32 %v936, %v1206
    %v1257 = vmul.f32 %v937, %v1207
    %v1258 = vmul.f32 %v938, %v1207
    %v1259 = vmul.f32 %v939, %v1208
    %v1260 = vmul.f32 %v940, %v1208
    %v1261 = vmul.f32 %v941, %v1209
    %v1262 = vmul.f32 %v942, %v1209
    %v1263 = vmul.f32 %v943, %v1210
    %v1264 = vmul.f32 %v944, %v1210
    %v1265 = vmul.f32 %v945, %v1211
    %v1266 = vmul.f32 %v946, %v1211
    %v1267 = vmul.f32 %v947, %v1212
    %v1268 = vmul.f32 %v948, %v1212
    %v1269 = vmul.f32 %v949, %v1213
    %v1270 = vmul.f32 %v950, %v1213
    %v1271 = vmul.f32 %v951, %v1214
    %v1272 = vmul.f32 %v952, %v1214
    %v1273 = vmul.f32 %v953, %v1215
    %v1274 = vmul.f32 %v954, %v1215
    %v1275 = vmul.f32 %v955, %v1216
    %v1276 = vmul.f32 %v956, %v1216
    %v1277 = vmul.f32 %v957, %v1217
    %v1278 = vmul.f32 %v958, %v1217
    %v1279 = vmul.f32 %v959, %v1218
    %v1280 = vmul.f32 %v960, %v1218
    %v1281 = vmul.f32 %v961, %v1219
    %v1282 = vmul.f32 %v962, %v1219
    %v1283 = vmul.f32 %v963, %v1220
    %v1284 = vmul.f32 %v964, %v1220
    %v1285 = vld [vmem:[%s4] sm:$0x3]
    %v1287 = vlaneseq
    %v1288 = vshrl.u32 %v1287, 7
    %v1289 = vsub.s32 0, %v1288
    %v1290 = vrot.slane %v1285, %v1289
    %v1291 = vlaneseq
    %v1292 = vshrl.u32 %v1291, 7
    %v1293 = vsub.s32 1, %v1292
    %v1294 = vrot.slane %v1285, %v1293
    %v1297 = vmul.f32 %v1221, %v1290
    %v1298 = vmul.f32 %v1222, %v1294
    %v1299 = vmul.f32 %v1223, %v1290
    %v1300 = vmul.f32 %v1224, %v1294
    %v1301 = vmul.f32 %v1225, %v1290
    %v1302 = vmul.f32 %v1226, %v1294
    %v1303 = vmul.f32 %v1227, %v1290
    %v1304 = vmul.f32 %v1228, %v1294
    %v1305 = vmul.f32 %v1229, %v1290
    %v1306 = vmul.f32 %v1230, %v1294
    %v1307 = vmul.f32 %v1231, %v1290
    %v1308 = vmul.f32 %v1232, %v1294
    %v1309 = vmul.f32 %v1233, %v1290
    %v1310 = vmul.f32 %v1234, %v1294
    %v1311 = vmul.f32 %v1235, %v1290
    %v1312 = vmul.f32 %v1236, %v1294
    %v1313 = vmul.f32 %v1237, %v1290
    %v1314 = vmul.f32 %v1238, %v1294
    %v1315 = vmul.f32 %v1239, %v1290
    %v1316 = vmul.f32 %v1240, %v1294
    %v1317 = vmul.f32 %v1241, %v1290
    %v1318 = vmul.f32 %v1242, %v1294
    %v1319 = vmul.f32 %v1243, %v1290
    %v1320 = vmul.f32 %v1244, %v1294
    %v1321 = vmul.f32 %v1245, %v1290
    %v1322 = vmul.f32 %v1246, %v1294
    %v1323 = vmul.f32 %v1247, %v1290
    %v1324 = vmul.f32 %v1248, %v1294
    %v1325 = vmul.f32 %v1249, %v1290
    %v1326 = vmul.f32 %v1250, %v1294
    %v1327 = vmul.f32 %v1251, %v1290
    %v1328 = vmul.f32 %v1252, %v1294
    %v1329 = vmul.f32 %v1253, %v1290
    %v1330 = vmul.f32 %v1254, %v1294
    %v1331 = vmul.f32 %v1255, %v1290
    %v1332 = vmul.f32 %v1256, %v1294
    %v1333 = vmul.f32 %v1257, %v1290
    %v1334 = vmul.f32 %v1258, %v1294
    %v1335 = vmul.f32 %v1259, %v1290
    %v1336 = vmul.f32 %v1260, %v1294
    %v1337 = vmul.f32 %v1261, %v1290
    %v1338 = vmul.f32 %v1262, %v1294
    %v1339 = vmul.f32 %v1263, %v1290
    %v1340 = vmul.f32 %v1264, %v1294
    %v1341 = vmul.f32 %v1265, %v1290
    %v1342 = vmul.f32 %v1266, %v1294
    %v1343 = vmul.f32 %v1267, %v1290
    %v1344 = vmul.f32 %v1268, %v1294
    %v1345 = vmul.f32 %v1269, %v1290
    %v1346 = vmul.f32 %v1270, %v1294
    %v1347 = vmul.f32 %v1271, %v1290
    %v1348 = vmul.f32 %v1272, %v1294
    %v1349 = vmul.f32 %v1273, %v1290
    %v1350 = vmul.f32 %v1274, %v1294
    %v1351 = vmul.f32 %v1275, %v1290
    %v1352 = vmul.f32 %v1276, %v1294
    %v1353 = vmul.f32 %v1277, %v1290
    %v1354 = vmul.f32 %v1278, %v1294
    %v1355 = vmul.f32 %v1279, %v1290
    %v1356 = vmul.f32 %v1280, %v1294
    %v1357 = vmul.f32 %v1281, %v1290
    %v1358 = vmul.f32 %v1282, %v1294
    %v1359 = vmul.f32 %v1283, %v1290
    %v1360 = vmul.f32 %v1284, %v1294
    %v1361 = vld [vmem:[%s5] sm:$0x3]
    %v1363 = vlaneseq
    %v1364 = vshrl.u32 %v1363, 7
    %v1365 = vsub.s32 0, %v1364
    %v1366 = vrot.slane %v1361, %v1365
    %v1367 = vlaneseq
    %v1368 = vshrl.u32 %v1367, 7
    %v1369 = vsub.s32 1, %v1368
    %v1370 = vrot.slane %v1361, %v1369
    %v1373 = vadd.f32 %v1297, %v1366
    %v1374 = vadd.f32 %v1298, %v1370
    %v1375 = vadd.f32 %v1299, %v1366
    %v1376 = vadd.f32 %v1300, %v1370
    %v1377 = vadd.f32 %v1301, %v1366
    %v1378 = vadd.f32 %v1302, %v1370
    %v1379 = vadd.f32 %v1303, %v1366
    %v1380 = vadd.f32 %v1304, %v1370
    %v1381 = vadd.f32 %v1305, %v1366
    %v1382 = vadd.f32 %v1306, %v1370
    %v1383 = vadd.f32 %v1307, %v1366
    %v1384 = vadd.f32 %v1308, %v1370
    %v1385 = vadd.f32 %v1309, %v1366
    %v1386 = vadd.f32 %v1310, %v1370
    %v1387 = vadd.f32 %v1311, %v1366
    %v1388 = vadd.f32 %v1312, %v1370
    %v1389 = vadd.f32 %v1313, %v1366
    %v1390 = vadd.f32 %v1314, %v1370
    %v1391 = vadd.f32 %v1315, %v1366
    %v1392 = vadd.f32 %v1316, %v1370
    %v1393 = vadd.f32 %v1317, %v1366
    %v1394 = vadd.f32 %v1318, %v1370
    %v1395 = vadd.f32 %v1319, %v1366
    %v1396 = vadd.f32 %v1320, %v1370
    %v1397 = vadd.f32 %v1321, %v1366
    %v1398 = vadd.f32 %v1322, %v1370
    %v1399 = vadd.f32 %v1323, %v1366
    %v1400 = vadd.f32 %v1324, %v1370
    %v1401 = vadd.f32 %v1325, %v1366
    %v1402 = vadd.f32 %v1326, %v1370
    %v1403 = vadd.f32 %v1327, %v1366
    %v1404 = vadd.f32 %v1328, %v1370
    %v1405 = vadd.f32 %v1329, %v1366
    %v1406 = vadd.f32 %v1330, %v1370
    %v1407 = vadd.f32 %v1331, %v1366
    %v1408 = vadd.f32 %v1332, %v1370
    %v1409 = vadd.f32 %v1333, %v1366
    %v1410 = vadd.f32 %v1334, %v1370
    %v1411 = vadd.f32 %v1335, %v1366
    %v1412 = vadd.f32 %v1336, %v1370
    %v1413 = vadd.f32 %v1337, %v1366
    %v1414 = vadd.f32 %v1338, %v1370
    %v1415 = vadd.f32 %v1339, %v1366
    %v1416 = vadd.f32 %v1340, %v1370
    %v1417 = vadd.f32 %v1341, %v1366
    %v1418 = vadd.f32 %v1342, %v1370
    %v1419 = vadd.f32 %v1343, %v1366
    %v1420 = vadd.f32 %v1344, %v1370
    %v1421 = vadd.f32 %v1345, %v1366
    %v1422 = vadd.f32 %v1346, %v1370
    %v1423 = vadd.f32 %v1347, %v1366
    %v1424 = vadd.f32 %v1348, %v1370
    %v1425 = vadd.f32 %v1349, %v1366
    %v1426 = vadd.f32 %v1350, %v1370
    %v1427 = vadd.f32 %v1351, %v1366
    %v1428 = vadd.f32 %v1352, %v1370
    %v1429 = vadd.f32 %v1353, %v1366
    %v1430 = vadd.f32 %v1354, %v1370
    %v1431 = vadd.f32 %v1355, %v1366
    %v1432 = vadd.f32 %v1356, %v1370
    %v1433 = vadd.f32 %v1357, %v1366
    %v1434 = vadd.f32 %v1358, %v1370
    %v1435 = vadd.f32 %v1359, %v1366
    %v1436 = vadd.f32 %v1360, %v1370
    %v1437 = vpack.c.bf16 %v1375, %v1373
    %v1438 = vpack.c.bf16 %v1376, %v1374
    %v1439 = vpack.c.bf16 %v1379, %v1377
    %v1440 = vpack.c.bf16 %v1380, %v1378
    %v1441 = vpack.c.bf16 %v1383, %v1381
    %v1442 = vpack.c.bf16 %v1384, %v1382
    %v1443 = vpack.c.bf16 %v1387, %v1385
    %v1444 = vpack.c.bf16 %v1388, %v1386
    %v1445 = vpack.c.bf16 %v1391, %v1389
    %v1446 = vpack.c.bf16 %v1392, %v1390
    %v1447 = vpack.c.bf16 %v1395, %v1393
    %v1448 = vpack.c.bf16 %v1396, %v1394
    %v1449 = vpack.c.bf16 %v1399, %v1397
    %v1450 = vpack.c.bf16 %v1400, %v1398
    %v1451 = vpack.c.bf16 %v1403, %v1401
    %v1452 = vpack.c.bf16 %v1404, %v1402
    %v1453 = vpack.c.bf16 %v1407, %v1405
    %v1454 = vpack.c.bf16 %v1408, %v1406
    %v1455 = vpack.c.bf16 %v1411, %v1409
    %v1456 = vpack.c.bf16 %v1412, %v1410
    %v1457 = vpack.c.bf16 %v1415, %v1413
    %v1458 = vpack.c.bf16 %v1416, %v1414
    %v1459 = vpack.c.bf16 %v1419, %v1417
    %v1460 = vpack.c.bf16 %v1420, %v1418
    %v1461 = vpack.c.bf16 %v1423, %v1421
    %v1462 = vpack.c.bf16 %v1424, %v1422
    %v1463 = vpack.c.bf16 %v1427, %v1425
    %v1464 = vpack.c.bf16 %v1428, %v1426
    %v1465 = vpack.c.bf16 %v1431, %v1429
    %v1466 = vpack.c.bf16 %v1432, %v1430
    %v1467 = vpack.c.bf16 %v1435, %v1433
    %v1468 = vpack.c.bf16 %v1436, %v1434
    %v1501 = vunpack.c.l.b16 %v1437
    %v1502 = vunpack.c.l.b16 %v1438
    %v1503 = vunpack.c.h.b16 %v1437
    %v1504 = vunpack.c.h.b16 %v1438
    %v1505 = vunpack.c.l.b16 %v1439
    %v1506 = vunpack.c.l.b16 %v1440
    %v1507 = vunpack.c.h.b16 %v1439
    %v1508 = vunpack.c.h.b16 %v1440
    %v1509 = vunpack.c.l.b16 %v1441
    %v1510 = vunpack.c.l.b16 %v1442
    %v1511 = vunpack.c.h.b16 %v1441
    %v1512 = vunpack.c.h.b16 %v1442
    %v1513 = vunpack.c.l.b16 %v1443
    %v1514 = vunpack.c.l.b16 %v1444
    %v1515 = vunpack.c.h.b16 %v1443
    %v1516 = vunpack.c.h.b16 %v1444
    %v1517 = vunpack.c.l.b16 %v1445
    %v1518 = vunpack.c.l.b16 %v1446
    %v1519 = vunpack.c.h.b16 %v1445
    %v1520 = vunpack.c.h.b16 %v1446
    %v1521 = vunpack.c.l.b16 %v1447
    %v1522 = vunpack.c.l.b16 %v1448
    %v1523 = vunpack.c.h.b16 %v1447
    %v1524 = vunpack.c.h.b16 %v1448
    %v1525 = vunpack.c.l.b16 %v1449
    %v1526 = vunpack.c.l.b16 %v1450
    %v1527 = vunpack.c.h.b16 %v1449
    %v1528 = vunpack.c.h.b16 %v1450
    %v1529 = vunpack.c.l.b16 %v1451
    %v1530 = vunpack.c.l.b16 %v1452
    %v1531 = vunpack.c.h.b16 %v1451
    %v1532 = vunpack.c.h.b16 %v1452
    %v1533 = vunpack.c.l.b16 %v1453
    %v1534 = vunpack.c.l.b16 %v1454
    %v1535 = vunpack.c.h.b16 %v1453
    %v1536 = vunpack.c.h.b16 %v1454
    %v1537 = vunpack.c.l.b16 %v1455
    %v1538 = vunpack.c.l.b16 %v1456
    %v1539 = vunpack.c.h.b16 %v1455
    %v1540 = vunpack.c.h.b16 %v1456
    %v1541 = vunpack.c.l.b16 %v1457
    %v1542 = vunpack.c.l.b16 %v1458
    %v1543 = vunpack.c.h.b16 %v1457
    %v1544 = vunpack.c.h.b16 %v1458
    %v1545 = vunpack.c.l.b16 %v1459
    %v1546 = vunpack.c.l.b16 %v1460
    %v1547 = vunpack.c.h.b16 %v1459
    %v1548 = vunpack.c.h.b16 %v1460
    %v1549 = vunpack.c.l.b16 %v1461
    %v1550 = vunpack.c.l.b16 %v1462
    %v1551 = vunpack.c.h.b16 %v1461
    %v1552 = vunpack.c.h.b16 %v1462
    %v1553 = vunpack.c.l.b16 %v1463
    %v1554 = vunpack.c.l.b16 %v1464
    %v1555 = vunpack.c.h.b16 %v1463
    %v1556 = vunpack.c.h.b16 %v1464
    %v1557 = vunpack.c.l.b16 %v1465
    %v1558 = vunpack.c.l.b16 %v1466
    %v1559 = vunpack.c.h.b16 %v1465
    %v1560 = vunpack.c.h.b16 %v1466
    %v1561 = vunpack.c.l.b16 %v1467
    %v1562 = vunpack.c.l.b16 %v1468
    %v1563 = vunpack.c.h.b16 %v1467
    %v1564 = vunpack.c.h.b16 %v1468
    %v1565 = vpack.c.b16 %v1502, %v1501
    %v1566 = vpack.c.b16 %v1504, %v1503
    %v1567 = vpack.c.b16 %v1506, %v1505
    %v1568 = vpack.c.b16 %v1508, %v1507
    %v1569 = vpack.c.b16 %v1510, %v1509
    %v1570 = vpack.c.b16 %v1512, %v1511
    %v1571 = vpack.c.b16 %v1514, %v1513
    %v1572 = vpack.c.b16 %v1516, %v1515
    %v1573 = vpack.c.b16 %v1518, %v1517
    %v1574 = vpack.c.b16 %v1520, %v1519
    %v1575 = vpack.c.b16 %v1522, %v1521
    %v1576 = vpack.c.b16 %v1524, %v1523
    %v1577 = vpack.c.b16 %v1526, %v1525
    %v1578 = vpack.c.b16 %v1528, %v1527
    %v1579 = vpack.c.b16 %v1530, %v1529
    %v1580 = vpack.c.b16 %v1532, %v1531
    %v1581 = vpack.c.b16 %v1534, %v1533
    %v1582 = vpack.c.b16 %v1536, %v1535
    %v1583 = vpack.c.b16 %v1538, %v1537
    %v1584 = vpack.c.b16 %v1540, %v1539
    %v1585 = vpack.c.b16 %v1542, %v1541
    %v1586 = vpack.c.b16 %v1544, %v1543
    %v1587 = vpack.c.b16 %v1546, %v1545
    %v1588 = vpack.c.b16 %v1548, %v1547
    %v1589 = vpack.c.b16 %v1550, %v1549
    %v1590 = vpack.c.b16 %v1552, %v1551
    %v1591 = vpack.c.b16 %v1554, %v1553
    %v1592 = vpack.c.b16 %v1556, %v1555
    %v1593 = vpack.c.b16 %v1558, %v1557
    %v1594 = vpack.c.b16 %v1560, %v1559
    %v1595 = vpack.c.b16 %v1562, %v1561
    %v1596 = vpack.c.b16 %v1564, %v1563
    %1629 = vst [vmem:[#allocation2] sm:$0xff] %v1565
    %1630 = vst [vmem:[#allocation2 + $0x8] sm:$0xff] %v1566
    %1631 = vst [vmem:[#allocation2 + $0x10] sm:$0xff] %v1567
    %1632 = vst [vmem:[#allocation2 + $0x18] sm:$0xff] %v1568
    %1633 = vst [vmem:[#allocation2 + $0x20] sm:$0xff] %v1569
    %1634 = vst [vmem:[#allocation2 + $0x28] sm:$0xff] %v1570
    %1635 = vst [vmem:[#allocation2 + $0x30] sm:$0xff] %v1571
    %1636 = vst [vmem:[#allocation2 + $0x38] sm:$0xff] %v1572
    %1637 = vst [vmem:[#allocation2 + $0x40] sm:$0xff] %v1573
    %1638 = vst [vmem:[#allocation2 + $0x48] sm:$0xff] %v1574
    %1639 = vst [vmem:[#allocation2 + $0x50] sm:$0xff] %v1575
    %1640 = vst [vmem:[#allocation2 + $0x58] sm:$0xff] %v1576
    %1641 = vst [vmem:[#allocation2 + $0x60] sm:$0xff] %v1577
    %1642 = vst [vmem:[#allocation2 + $0x68] sm:$0xff] %v1578
    %1643 = vst [vmem:[#allocation2 + $0x70] sm:$0xff] %v1579
    %1644 = vst [vmem:[#allocation2 + $0x78] sm:$0xff] %v1580
    %1645 = vst [vmem:[#allocation2 + $0x80] sm:$0xff] %v1581
    %1646 = vst [vmem:[#allocation2 + $0x88] sm:$0xff] %v1582
    %1647 = vst [vmem:[#allocation2 + $0x90] sm:$0xff] %v1583
    %1648 = vst [vmem:[#allocation2 + $0x98] sm:$0xff] %v1584
    %1649 = vst [vmem:[#allocation2 + $0xa0] sm:$0xff] %v1585
    %1650 = vst [vmem:[#allocation2 + $0xa8] sm:$0xff] %v1586
    %1651 = vst [vmem:[#allocation2 + $0xb0] sm:$0xff] %v1587
    %1652 = vst [vmem:[#allocation2 + $0xb8] sm:$0xff] %v1588
    %1653 = vst [vmem:[#allocation2 + $0xc0] sm:$0xff] %v1589
    %1654 = vst [vmem:[#allocation2 + $0xc8] sm:$0xff] %v1590
    %1655 = vst [vmem:[#allocation2 + $0xd0] sm:$0xff] %v1591
    %1656 = vst [vmem:[#allocation2 + $0xd8] sm:$0xff] %v1592
    %1657 = vst [vmem:[#allocation2 + $0xe0] sm:$0xff] %v1593
    %1658 = vst [vmem:[#allocation2 + $0xe8] sm:$0xff] %v1594
    %1659 = vst [vmem:[#allocation2 + $0xf0] sm:$0xff] %v1595
    %1660 = vst [vmem:[#allocation2 + $0xf8] sm:$0xff] %v1596
    // Predicated region
    $region26: #{bert_self_output.1} parent=1 // pred_check
      _
    $region27: #{bert_self_output.1} parent=1 // pred_check_branch
      %1662 = sbr.rel (0) target = $region29
    $region28: #{bert_self_output.1} parent=1 // pred_region
      // Predicated region
      $region30: #{bert_self_output.1} parent=28 // pred_check
        _
      $region31: #{bert_self_output.1} parent=28 // pred_check_branch
        %1664 = sbr.rel (0) target = $region33
      $region32: #{bert_self_output.1} parent=28 // pred_region
        // Predicated region
        $region34: #{bert_self_output.1} parent=32 // pred_check
          _
        $region35: #{bert_self_output.1} parent=32 // pred_check_branch
          %1666 = sbr.rel (0) target = $region37
        $region36: #{bert_self_output.1} parent=32 // pred_region
          // Predicated region
          $region49: #{bert_self_output.1} parent=36 // pred_check
            _
          $region50: #{bert_self_output.1} parent=36 // pred_check_branch
            %1729 = sbr.rel (0) target = $region52
          $region51: #{bert_self_output.1} parent=36 // pred_region
            loop: start=0, step=1, limit=1
            $region53: #{bert_self_output.1} parent=51 // loop_pre_header
              _
            $region54: #{bert_self_output.1} parent=51 // loop_header
              %s1731 = sphi 0, %s1735
              %p1732 = scmp.ge.s32.totalorder %s1731, 1
              %s1736 = sphi [#allocation2], [#allocation2]
              %s1737 = sphi %s6, %s6
            $region55: #{bert_self_output.1} parent=51 // loop_header_branch
              %1734 = sbr.rel (%p1732) target = $region59
            $region56: #{bert_self_output.1} parent=51 // loop_body
              %v1738 = vld [vmem:[%s1736] sm:$0xff]
              %1739 = vst [vmem:[%s1737] sm:$0xff] %v1738
              %v1740 = vld [vmem:[%s1736 + $0x8] sm:$0xff]
              %1741 = vst [vmem:[%s1737 + $0x8] sm:$0xff] %v1740
              %v1742 = vld [vmem:[%s1736 + $0x10] sm:$0xff]
              %1743 = vst [vmem:[%s1737 + $0x10] sm:$0xff] %v1742
              %v1744 = vld [vmem:[%s1736 + $0x18] sm:$0xff]
              %1745 = vst [vmem:[%s1737 + $0x18] sm:$0xff] %v1744
              %v1746 = vld [vmem:[%s1736 + $0x20] sm:$0xff]
              %1747 = vst [vmem:[%s1737 + $0x20] sm:$0xff] %v1746
              %v1748 = vld [vmem:[%s1736 + $0x28] sm:$0xff]
              %1749 = vst [vmem:[%s1737 + $0x28] sm:$0xff] %v1748
              %v1750 = vld [vmem:[%s1736 + $0x30] sm:$0xff]
              %1751 = vst [vmem:[%s1737 + $0x30] sm:$0xff] %v1750
              %v1752 = vld [vmem:[%s1736 + $0x38] sm:$0xff]
              %1753 = vst [vmem:[%s1737 + $0x38] sm:$0xff] %v1752
              %v1754 = vld [vmem:[%s1736 + $0x40] sm:$0xff]
              %1755 = vst [vmem:[%s1737 + $0x40] sm:$0xff] %v1754
              %v1756 = vld [vmem:[%s1736 + $0x48] sm:$0xff]
              %1757 = vst [vmem:[%s1737 + $0x48] sm:$0xff] %v1756
              %v1758 = vld [vmem:[%s1736 + $0x50] sm:$0xff]
              %1759 = vst [vmem:[%s1737 + $0x50] sm:$0xff] %v1758
              %v1760 = vld [vmem:[%s1736 + $0x58] sm:$0xff]
              %1761 = vst [vmem:[%s1737 + $0x58] sm:$0xff] %v1760
              %v1762 = vld [vmem:[%s1736 + $0x60] sm:$0xff]
              %1763 = vst [vmem:[%s1737 + $0x60] sm:$0xff] %v1762
              %v1764 = vld [vmem:[%s1736 + $0x68] sm:$0xff]
              %1765 = vst [vmem:[%s1737 + $0x68] sm:$0xff] %v1764
              %v1766 = vld [vmem:[%s1736 + $0x70] sm:$0xff]
              %1767 = vst [vmem:[%s1737 + $0x70] sm:$0xff] %v1766
              %v1768 = vld [vmem:[%s1736 + $0x78] sm:$0xff]
              %1769 = vst [vmem:[%s1737 + $0x78] sm:$0xff] %v1768
              %v1770 = vld [vmem:[%s1736 + $0x80] sm:$0xff]
              %1771 = vst [vmem:[%s1737 + $0x80] sm:$0xff] %v1770
              %v1772 = vld [vmem:[%s1736 + $0x88] sm:$0xff]
              %1773 = vst [vmem:[%s1737 + $0x88] sm:$0xff] %v1772
              %v1774 = vld [vmem:[%s1736 + $0x90] sm:$0xff]
              %1775 = vst [vmem:[%s1737 + $0x90] sm:$0xff] %v1774
              %v1776 = vld [vmem:[%s1736 + $0x98] sm:$0xff]
              %1777 = vst [vmem:[%s1737 + $0x98] sm:$0xff] %v1776
              %v1778 = vld [vmem:[%s1736 + $0xa0] sm:$0xff]
              %1779 = vst [vmem:[%s1737 + $0xa0] sm:$0xff] %v1778
              %v1780 = vld [vmem:[%s1736 + $0xa8] sm:$0xff]
              %1781 = vst [vmem:[%s1737 + $0xa8] sm:$0xff] %v1780
              %v1782 = vld [vmem:[%s1736 + $0xb0] sm:$0xff]
              %1783 = vst [vmem:[%s1737 + $0xb0] sm:$0xff] %v1782
              %v1784 = vld [vmem:[%s1736 + $0xb8] sm:$0xff]
              %1785 = vst [vmem:[%s1737 + $0xb8] sm:$0xff] %v1784
              %v1786 = vld [vmem:[%s1736 + $0xc0] sm:$0xff]
              %1787 = vst [vmem:[%s1737 + $0xc0] sm:$0xff] %v1786
            $region57: #{bert_self_output.1} parent=51 // loop_footer
              %s1735 = sadd.s32 1, %s1731
            $region58: #{bert_self_output.1} parent=51 // loop_footer_branch
              %1730 = sbr.rel target = $region54
            $region59: #{bert_self_output.1} parent=51 // loop_exit
              _
          $region52: #{bert_self_output.1} parent=36 // pred_fallthru
            _
          // Predicated region
          $region60: #{bert_self_output.1} parent=36 // pred_check
            _
          $region61: #{bert_self_output.1} parent=36 // pred_check_branch
            %1789 = sbr.rel target = $region63
          $region62: #{bert_self_output.1} parent=36 // pred_region
            _
          $region63: #{bert_self_output.1} parent=36 // pred_fallthru
            _
        $region37: #{bert_self_output.1} parent=32 // pred_fallthru
          _
        // Predicated region
        $region38: #{bert_self_output.1} parent=32 // pred_check
          _
        $region39: #{bert_self_output.1} parent=32 // pred_check_branch
          %1668 = sbr.rel target = $region41
        $region40: #{bert_self_output.1} parent=32 // pred_region
          loop: start=0, step=1, limit=1
          $region42: #{bert_self_output.1} parent=40 // loop_pre_header
            _
          $region43: #{bert_self_output.1} parent=40 // loop_header
            %s1671 = sphi 0, %s1675
            %p1672 = scmp.ge.s32.totalorder %s1671, 1
            %s1676 = sphi [#allocation2], [#allocation2]
            %s1677 = sphi %s6, %s6
          $region44: #{bert_self_output.1} parent=40 // loop_header_branch
            %1674 = sbr.rel (%p1672) target = $region48
          $region45: #{bert_self_output.1} parent=40 // loop_body
            %v1678 = vld [vmem:[%s1676] sm:$0xff]
            %1679 = vst [vmem:[%s1677] sm:$0xff] %v1678
            %v1680 = vld [vmem:[%s1676 + $0x8] sm:$0xff]
            %1681 = vst [vmem:[%s1677 + $0x8] sm:$0xff] %v1680
            %v1682 = vld [vmem:[%s1676 + $0x10] sm:$0xff]
            %1683 = vst [vmem:[%s1677 + $0x10] sm:$0xff] %v1682
            %v1684 = vld [vmem:[%s1676 + $0x18] sm:$0xff]
            %1685 = vst [vmem:[%s1677 + $0x18] sm:$0xff] %v1684
            %v1686 = vld [vmem:[%s1676 + $0x20] sm:$0xff]
            %1687 = vst [vmem:[%s1677 + $0x20] sm:$0xff] %v1686
            %v1688 = vld [vmem:[%s1676 + $0x28] sm:$0xff]
            %1689 = vst [vmem:[%s1677 + $0x28] sm:$0xff] %v1688
            %v1690 = vld [vmem:[%s1676 + $0x30] sm:$0xff]
            %1691 = vst [vmem:[%s1677 + $0x30] sm:$0xff] %v1690
            %v1692 = vld [vmem:[%s1676 + $0x38] sm:$0xff]
            %1693 = vst [vmem:[%s1677 + $0x38] sm:$0xff] %v1692
            %v1694 = vld [vmem:[%s1676 + $0x40] sm:$0xff]
            %1695 = vst [vmem:[%s1677 + $0x40] sm:$0xff] %v1694
            %v1696 = vld [vmem:[%s1676 + $0x48] sm:$0xff]
            %1697 = vst [vmem:[%s1677 + $0x48] sm:$0xff] %v1696
            %v1698 = vld [vmem:[%s1676 + $0x50] sm:$0xff]
            %1699 = vst [vmem:[%s1677 + $0x50] sm:$0xff] %v1698
            %v1700 = vld [vmem:[%s1676 + $0x58] sm:$0xff]
            %1701 = vst [vmem:[%s1677 + $0x58] sm:$0xff] %v1700
            %v1702 = vld [vmem:[%s1676 + $0x60] sm:$0xff]
            %1703 = vst [vmem:[%s1677 + $0x60] sm:$0xff] %v1702
            %v1704 = vld [vmem:[%s1676 + $0x68] sm:$0xff]
            %1705 = vst [vmem:[%s1677 + $0x68] sm:$0xff] %v1704
            %v1706 = vld [vmem:[%s1676 + $0x70] sm:$0xff]
            %1707 = vst [vmem:[%s1677 + $0x70] sm:$0xff] %v1706
            %v1708 = vld [vmem:[%s1676 + $0x78] sm:$0xff]
            %1709 = vst [vmem:[%s1677 + $0x78] sm:$0xff] %v1708
            %v1710 = vld [vmem:[%s1676 + $0x80] sm:$0xff]
            %1711 = vst [vmem:[%s1677 + $0x80] sm:$0xff] %v1710
            %v1712 = vld [vmem:[%s1676 + $0x88] sm:$0xff]
            %1713 = vst [vmem:[%s1677 + $0x88] sm:$0xff] %v1712
            %v1714 = vld [vmem:[%s1676 + $0x90] sm:$0xff]
            %1715 = vst [vmem:[%s1677 + $0x90] sm:$0xff] %v1714
            %v1716 = vld [vmem:[%s1676 + $0x98] sm:$0xff]
            %1717 = vst [vmem:[%s1677 + $0x98] sm:$0xff] %v1716
            %v1718 = vld [vmem:[%s1676 + $0xa0] sm:$0xff]
            %1719 = vst [vmem:[%s1677 + $0xa0] sm:$0xff] %v1718
            %v1720 = vld [vmem:[%s1676 + $0xa8] sm:$0xff]
            %1721 = vst [vmem:[%s1677 + $0xa8] sm:$0xff] %v1720
            %v1722 = vld [vmem:[%s1676 + $0xb0] sm:$0xff]
            %1723 = vst [vmem:[%s1677 + $0xb0] sm:$0xff] %v1722
            %v1724 = vld [vmem:[%s1676 + $0xb8] sm:$0xff]
            %1725 = vst [vmem:[%s1677 + $0xb8] sm:$0xff] %v1724
            %v1726 = vld [vmem:[%s1676 + $0xc0] sm:$0xff]
            %1727 = vst [vmem:[%s1677 + $0xc0] sm:$0xff] %v1726
          $region46: #{bert_self_output.1} parent=40 // loop_footer
            %s1675 = sadd.s32 1, %s1671
          $region47: #{bert_self_output.1} parent=40 // loop_footer_branch
            %1670 = sbr.rel target = $region43
          $region48: #{bert_self_output.1} parent=40 // loop_exit
            _
        $region41: #{bert_self_output.1} parent=32 // pred_fallthru
          _
      $region33: #{bert_self_output.1} parent=28 // pred_fallthru
        _
      %1790 = vnop
    $region29: #{bert_self_output.1} parent=1 // pred_fallthru
      _
    // Predicated region
    $region64: #{bert_self_output.1} parent=1 // pred_check
      _
    $region65: #{bert_self_output.1} parent=1 // pred_check_branch
      %1792 = sbr.rel (0) target = $region67
    $region66: #{bert_self_output.1} parent=1 // pred_region
      _
    $region67: #{bert_self_output.1} parent=1 // pred_fallthru
      _

</llo_original>
